<compile_context>
chip_gen: v6e
topology: v6e:2x2x1
jax: 0.10.0
libtpu: 0.0.40
codegen_flags: <defaults>
</compile_context>

<pallas_src>
import functools

import jax
import jax.numpy as jnp
import numpy as np
from jax.experimental import pallas as pl
from jax.experimental.pallas import tpu as pltpu

_ALPHA = 0.25
_CLAMP = 1e-4


def _make_focal_kernel(n_total: int):
    """Kernel factory; n_total = number of real (unpadded) anchors."""

    def kernel(nvalid_ref, anc_ref, cls_ref, reg_ref, ann_ref, out_ref):
        # nvalid_ref: (B,) int32 SMEM scalar-prefetch -- valid boxes per image
        # anc_ref:    (TN, 11) anchor table rows:
        #             x1 y1 x2 y2 area w h cx cy 1/w 1/h   (precomputed)
        # cls_ref:    (1, TN, K)  classification probs, native layout
        # reg_ref:    (1, TN, 4)  regression deltas, native layout
        # ann_ref:    (1, 5, M)   annotation rows x1 y1 x2 y2 label (M on lanes)
        # out_ref:    (1, 8, 128) accumulator rows: cls_sum, reg_sum, num_pos
        f32 = jnp.float32
        b = pl.program_id(0)
        n = pl.program_id(1)

        @pl.when(n == 0)
        def _init():
            out_ref[...] = jnp.zeros_like(out_ref)

        # Skip the whole (TN, K) focal computation for images with no valid
        # annotations (PyTorch returns 0 for them).
        @pl.when(nvalid_ref[b] > 0)
        def _compute():
            tn = anc_ref.shape[0]

            anc = anc_ref[...].astype(f32)                        # (TN, 11)
            ax1, ay1 = anc[:, 0:1], anc[:, 1:2]
            ax2, ay2 = anc[:, 2:3], anc[:, 3:4]
            area_a = anc[:, 4:5]
            acx, acy = anc[:, 7:8], anc[:, 8:9]
            inv_aw, inv_ah = anc[:, 9:10], anc[:, 10:11]

            ann = ann_ref[0].astype(f32)                          # (5, M)
            bx1, by1 = ann[0:1, :], ann[1:2, :]                   # (1, M)
            bx2, by2 = ann[2:3, :], ann[3:4, :]
            blabel = ann[4:5, :]
            valid = blabel != -1.0                                # (1, M)

            # Mask for pad anchors in the (possibly padded) last tile.
            g_idx = n * tn + jax.lax.broadcasted_iota(jnp.int32, (tn, 1), 0)
            amask = g_idx < n_total                               # (TN, 1)

            # ---- IoU: anchors on sublanes, boxes on lanes ----
            iw = jnp.maximum(jnp.minimum(ax2, bx2) - jnp.maximum(ax1, bx1), 0.0)
            ih = jnp.maximum(jnp.minimum(ay2, by2) - jnp.maximum(ay1, by1), 0.0)
            inter = iw * ih                                       # (TN, M)
            area_b = (bx2 - bx1) * (by2 - by1)                    # (1, M)
            union = jnp.maximum(area_a + area_b - inter, 1e-8)
            # Exact divide: IoU feeds 0.4 / 0.5 threshold tests.
            iou = jnp.where(valid, inter / union, -1.0)           # (TN, M)

            iou_max = jnp.max(iou, axis=1, keepdims=True)         # (TN, 1)
            m = iou.shape[1]
            m_idx = jax.lax.broadcasted_iota(jnp.int32, iou.shape, 1)
            winner = jnp.min(jnp.where(iou >= iou_max, m_idx, m),
                             axis=1, keepdims=True)               # first argmax
            onehot = (m_idx == winner).astype(f32)                # (TN, M)

            # One-hot gather of the assigned annotation (exact f32 on VPU/XLU).
            # TODO(synk): for large M switch to one MXU dot_general with
            # Precision.HIGHEST (coordinates must not round through bf16).
            def assigned(row):                                    # (1,M)->(TN,1)
                return jnp.sum(onehot * row, axis=1, keepdims=True)

            asg_x1, asg_y1 = assigned(bx1), assigned(by1)
            asg_x2, asg_y2 = assigned(bx2), assigned(by2)
            asg_lbl = assigned(blabel)

            pos = (iou_max >= 0.5) & amask                        # (TN, 1)
            neg = iou_max < 0.4
            num_pos = jnp.sum(pos.astype(f32), keepdims=True)     # (1, 1)

            # ---- classification focal loss (single-log BCE) ----
            cls = jnp.clip(cls_ref[0].astype(f32), _CLAMP, 1.0 - _CLAMP)
            k_idx = jax.lax.broadcasted_iota(jnp.int32, cls.shape, 1)
            cls_onehot = (k_idx.astype(f32) == asg_lbl).astype(f32)
            targets = jnp.where(pos, cls_onehot,
                                jnp.where(neg, 0.0, -1.0))        # (TN, K)
            is_one = targets == 1.0
            # targets is only ever 1 / 0 / -1; -1 rows are masked below, so a
            # single log is exact: bce = -log(p) if t==1 else -log(1-p).
            pt = jnp.where(is_one, cls, 1.0 - cls)
            fw = jnp.where(is_one, 1.0 - cls, cls)
            alpha_f = jnp.where(is_one, _ALPHA, 1.0 - _ALPHA)
            cls_loss = jnp.where((targets != -1.0) & amask,
                                 alpha_f * fw * fw * (-jnp.log(pt)), 0.0)
            cls_sum = jnp.sum(cls_loss, keepdims=True)            # (1, 1)

            # ---- regression smooth-L1 on positive anchors ----
            gw0 = asg_x2 - asg_x1
            gh0 = asg_y2 - asg_y1
            gcx = asg_x1 + 0.5 * gw0
            gcy = asg_y1 + 0.5 * gh0
            gw = jnp.maximum(gw0, 1.0)
            gh = jnp.maximum(gh0, 1.0)

            # /0.1 -> *10, /0.2 -> *5, anchor reciprocals precomputed.
            tdx = (gcx - acx) * inv_aw * 10.0
            tdy = (gcy - acy) * inv_ah * 10.0
            tdw = jnp.log(gw * inv_aw) * 5.0
            tdh = jnp.log(gh * inv_ah) * 5.0

            reg = reg_ref[0].astype(f32)                          # (TN, 4)

            def sl1_sum(t, r):                                    # -> (1, 1)
                d = jnp.abs(t - r)
                l = jnp.where(d <= 1.0 / 9.0, 4.5 * d * d, d - 0.5 / 9.0)
                return jnp.sum(jnp.where(pos, l, 0.0), keepdims=True)

            reg_sum = (sl1_sum(tdx, reg[:, 0:1]) + sl1_sum(tdy, reg[:, 1:2]) +
                       sl1_sum(tdw, reg[:, 2:3]) + sl1_sum(tdh, reg[:, 3:4]))

            # ---- accumulate raw partials into the resident output block ----
            row = jax.lax.broadcasted_iota(jnp.int32, (8, 128), 0)
            partial = jnp.where(row == 0, cls_sum,
                      jnp.where(row == 1, reg_sum,
                      jnp.where(row == 2, num_pos, 0.0)))
            out_ref[0] = out_ref[0] + partial

    return kernel


def _round_up(x, m):
    return ((x + m - 1) // m) * m


@functools.partial(jax.jit, static_argnames=("tn",))
def focal_loss(classifications, regressions, anchors, annotations, *, tn=None):
    """classifications (B,N,K), regressions (B,N,4), anchors (1,N,4),
    annotations (B,M,5). Returns (cls_loss (1,), reg_loss (1,)) like PyTorch."""
    B, N, K = classifications.shape
    M = annotations.shape[1]
    f32 = jnp.float32

    # Anchor tile along N.  At production N sweep per generation:
    # TN ~ 1024-2048 on v7x (64 MiB VMEM), ~2048-4096 on v5e/v6e (128 MiB).
    if tn is None:
        tn = min(_round_up(N, 8), 1024)
    tn = max(8, (int(tn) // 8) * 8)
    n_pad = _round_up(N, tn)
    n_tiles = n_pad // tn

    # One-time anchor table (hoisted anchor-only math):
    # x1 y1 x2 y2 area w h cx cy 1/w 1/h.
    anchor = anchors[0].astype(f32)                               # (N, 4)
    ax1, ay1, ax2, ay2 = anchor[:, 0], anchor[:, 1], anchor[:, 2], anchor[:, 3]
    aw = ax2 - ax1
    ah = ay2 - ay1
    anc_tab = jnp.stack(
        [ax1, ay1, ax2, ay2, aw * ah, aw, ah,
         ax1 + 0.5 * aw, ay1 + 0.5 * ah, 1.0 / aw, 1.0 / ah], axis=1)  # (N,11)

    if n_pad != N:
        pad = n_pad - N
        # Benign pad anchor (unit box at origin); everything it produces is
        # masked out inside the kernel via the global-index anchor mask.
        pad_row = jnp.array([[0., 0., 1., 1., 1., 1., 1., .5, .5, 1., 1.]], f32)
        anc_tab = jnp.concatenate([anc_tab, jnp.tile(pad_row, (pad, 1))], 0)
        classifications = jnp.pad(classifications, ((0, 0), (0, pad), (0, 0)),
                                  constant_values=0.5)
        regressions = jnp.pad(regressions, ((0, 0), (0, pad), (0, 0)))

    # Only the tiny per-image tensors are re-laid-out: annotations to (B,5,M)
    # so box coords broadcast along lanes; valid-box count for the pl.when.
    ann_t = jnp.transpose(annotations.astype(f32), (0, 2, 1))     # (B, 5, M)
    nvalid = jnp.sum((annotations[:, :, 4] != -1).astype(jnp.int32), axis=1)

    out = pl.pallas_call(
        _make_focal_kernel(N),
        out_shape=jax.ShapeDtypeStruct((B, 8, 128), f32),
        grid_spec=pltpu.PrefetchScalarGridSpec(
            num_scalar_prefetch=1,
            grid=(B, n_tiles),                 # anchor axis last: accumulator
            in_specs=[
                pl.BlockSpec((tn, 11), lambda b, n, nv: (n, 0)),
                pl.BlockSpec((1, tn, K), lambda b, n, nv: (b, n, 0)),
                pl.BlockSpec((1, tn, 4), lambda b, n, nv: (b, n, 0)),
                pl.BlockSpec((1, 5, M), lambda b, n, nv: (b, 0, 0)),
            ],
            out_specs=pl.BlockSpec((1, 8, 128), lambda b, n, nv: (b, 0, 0)),
        ),
        compiler_params=pltpu.CompilerParams(
            # TODO(synk): on v7x (2 TCs) flatten B*N_tiles into one parallel
            # axis; with tiny B the batch axis alone can leave a core idle.
            dimension_semantics=("parallel", "arbitrary"),
            vmem_limit_bytes=48 * 1024 * 1024,
        ),
    )(nvalid, anc_tab, classifications, regressions, ann_t)

    cls_sum = out[:, 0, 0]
    reg_sum = out[:, 1, 0]
    num_pos = out[:, 2, 0]
    has_valid = nvalid > 0
    cls_per = jnp.where(has_valid, cls_sum / jnp.maximum(num_pos, 1.0), 0.0)
    reg_per = jnp.where(has_valid & (num_pos > 0.0),
                        reg_sum / jnp.maximum(4.0 * num_pos, 1.0), 0.0)
    return (jnp.mean(cls_per, keepdims=True),
            jnp.mean(reg_per, keepdims=True))


# ----------------------- NumPy reference (faithful port) -----------------------
def _calc_iou_np(a, b):
    area = (b[:, 2] - b[:, 0]) * (b[:, 3] - b[:, 1])
    iw = np.minimum(a[:, 2][:, None], b[:, 2]) - np.maximum(a[:, 0][:, None], b[:, 0])
    ih = np.minimum(a[:, 3][:, None], b[:, 3]) - np.maximum(a[:, 1][:, None], b[:, 1])
    iw = np.clip(iw, 0.0, None)
    ih = np.clip(ih, 0.0, None)
    ua = ((a[:, 2] - a[:, 0]) * (a[:, 3] - a[:, 1]))[:, None] + area - iw * ih
    ua = np.clip(ua, 1e-8, None)
    return iw * ih / ua


def focal_loss_reference(classifications, regressions, anchors, annotations):
    alpha, gamma = 0.25, 2.0
    cls_np = np.asarray(classifications, np.float32)
    reg_np = np.asarray(regressions, np.float32)
    anc_np = np.asarray(anchors, np.float32)
    ann_np = np.asarray(annotations, np.float32)
    B = cls_np.shape[0]
    anchor = anc_np[0]
    aw = anchor[:, 2] - anchor[:, 0]
    ah = anchor[:, 3] - anchor[:, 1]
    acx = anchor[:, 0] + 0.5 * aw
    acy = anchor[:, 1] + 0.5 * ah
    cls_losses, reg_losses = [], []
    for j in range(B):
        classification = np.clip(cls_np[j], 1e-4, 1.0 - 1e-4)
        regression = reg_np[j]
        bbox = ann_np[j]
        bbox = bbox[bbox[:, 4] != -1]
        if bbox.shape[0] == 0:
            cls_losses.append(np.float32(0.0))
            reg_losses.append(np.float32(0.0))
            continue
        iou = _calc_iou_np(anchor, bbox[:, :4])
        iou_max = iou.max(axis=1)
        iou_arg = iou.argmax(axis=1)
        targets = -np.ones_like(classification)
        targets[iou_max < 0.4, :] = 0
        pos = iou_max >= 0.5
        num_pos = pos.sum()
        assigned = bbox[iou_arg]
        targets[pos, :] = 0
        targets[pos, assigned[pos, 4].astype(np.int64)] = 1
        alpha_factor = np.where(targets == 1.0, alpha, 1.0 - alpha)
        focal_weight = np.where(targets == 1.0, 1.0 - classification, classification)
        focal_weight = alpha_factor * focal_weight ** gamma
        bce = -(targets * np.log(classification) +
                (1.0 - targets) * np.log(1.0 - classification))
        cls_loss = np.where(targets != -1.0, focal_weight * bce, 0.0)
        cls_losses.append(cls_loss.sum() / max(float(num_pos), 1.0))
        if num_pos > 0:
            asg = assigned[pos]
            awp, ahp = aw[pos], ah[pos]
            acxp, acyp = acx[pos], acy[pos]
            gw = asg[:, 2] - asg[:, 0]
            gh = asg[:, 3] - asg[:, 1]
            gcx = asg[:, 0] + 0.5 * gw
            gcy = asg[:, 1] + 0.5 * gh
            gw = np.clip(gw, 1.0, None)
            gh = np.clip(gh, 1.0, None)
            t = np.stack([(gcx - acxp) / awp, (gcy - acyp) / ahp,
                          np.log(gw / awp), np.log(gh / ahp)]).T
            t = t / np.array([[0.1, 0.1, 0.2, 0.2]], np.float32)
            diff = np.abs(t - regression[pos])
            rl = np.where(diff <= 1.0 / 9.0, 0.5 * 9.0 * diff * diff, diff - 0.5 / 9.0)
            reg_losses.append(rl.mean())
        else:
            reg_losses.append(np.float32(0.0))
    return (np.array([np.mean(np.stack(cls_losses))], np.float32),
            np.array([np.mean(np.stack(reg_losses))], np.float32))


if __name__ == "__main__":
    B, N, K, M = 3, 128, 8, 8

    # Anchor grid: 16 x 8 anchors of size 32x32 on an 8-pixel stride.
    gx, gy = np.meshgrid(np.arange(16, dtype=np.float32),
                         np.arange(8, dtype=np.float32))
    x1 = (gx * 8.0).reshape(-1)
    y1 = (gy * 8.0).reshape(-1)
    anchors_np = np.stack([x1, y1, x1 + 32.0, y1 + 32.0], axis=1)[None]  # (1,N,4)

    def _box(aidx, dx, dy, label):
        a = anchors_np[0, aidx]
        return np.array([a[0] + dx, a[1] + dy, a[2] + dx, a[3] + dy, label],
                        np.float32)

    annotations_np = -np.ones((B, M, 5), np.float32)
    annotations_np[0, 0] = _box(5, 2.0, -1.0, 3)
    annotations_np[0, 1] = _box(40, -3.0, 2.0, 0)
    annotations_np[0, 2] = _box(100, 1.0, 1.5, 7)
    annotations_np[1, 0] = _box(77, 0.5, -2.5, 4)
    # batch 2: no valid annotations (exercises the pl.when zero-loss skip)

    key = jax.random.PRNGKey(0)
    kc, kr = jax.random.split(key)
    classifications = jax.random.uniform(kc, (B, N, K), jnp.float32,
                                         minval=0.02, maxval=0.98)
    regressions = 0.1 * jax.random.normal(kr, (B, N, 4), jnp.float32)
    anchors = jnp.asarray(anchors_np)
    annotations = jnp.asarray(annotations_np)

    ref_cls, ref_reg = focal_loss_reference(classifications, regressions,
                                            anchors, annotations)

    # tn=64: two N tiles per image (tiled accumulator path).
    cls_loss, reg_loss = focal_loss(classifications, regressions,
                                    anchors, annotations, tn=64)
    cls_loss, reg_loss = jax.block_until_ready((cls_loss, reg_loss))
    assert cls_loss.shape == (1,) and reg_loss.shape == (1,)
    np.testing.assert_allclose(np.asarray(cls_loss), ref_cls, rtol=2e-4, atol=1e-5)
    np.testing.assert_allclose(np.asarray(reg_loss), ref_reg, rtol=2e-4, atol=1e-5)

    # tn=48: N % tn != 0 -> exercises the padded last tile + anchor masking.
    cls_loss2, reg_loss2 = focal_loss(classifications, regressions,
                                      anchors, annotations, tn=48)
    cls_loss2, reg_loss2 = jax.block_until_ready((cls_loss2, reg_loss2))
    np.testing.assert_allclose(np.asarray(cls_loss2), ref_cls, rtol=2e-4, atol=1e-5)
    np.testing.assert_allclose(np.asarray(reg_loss2), ref_reg, rtol=2e-4, atol=1e-5)

    print("KERNEL_OK")
</pallas_src>

<mosaic_0001>
module attributes {stable_mosaic.version = 11 : i64} {
  func.func @kernel(%arg0: i32, %arg1: i32, %arg2: memref<3xi32, #tpu.memory_space<smem>>, %arg3: memref<64x11xf32, #tpu.memory_space<vmem>>, %arg4: memref<1x64x8xf32, #tpu.memory_space<vmem>>, %arg5: memref<1x64x4xf32, #tpu.memory_space<vmem>>, %arg6: memref<1x5x8xf32, #tpu.memory_space<vmem>>, %arg7: memref<1x8x128xf32, #tpu.memory_space<vmem>>) attributes {dimension_semantics = [#tpu.dimension_semantics<parallel>, #tpu.dimension_semantics<arbitrary>], iteration_bounds = array<i64: 3, 2>, scalar_prefetch = 1 : i64, scratch_operands = 0 : i64, tpu.core_type = #tpu.core_type<tc>, window_params = [{transform_indices = @transform_0, window_bounds = array<i64: 64, 11>}, {transform_indices = @transform_1, window_bounds = array<i64: 1, 64, 8>}, {transform_indices = @transform_2, window_bounds = array<i64: 1, 64, 4>}, {transform_indices = @transform_3, window_bounds = array<i64: 1, 5, 8>}, {transform_indices = @transform_4, window_bounds = array<i64: 1, 8, 128>}]} {
    %c0_i32 = arith.constant 0 : i32
    %0 = arith.cmpi eq, %arg1, %c0_i32 : i32
    %1 = arith.extui %0 : i1 to i32
    %c0_i32_0 = arith.constant 0 : i32
    %2 = arith.cmpi ne, %1, %c0_i32_0 : i32
    scf.if %2 {
      %cst = arith.constant 0.000000e+00 : f32
      %8 = vector.broadcast %cst : f32 to vector<1x8x128xf32>
      %c0 = arith.constant 0 : index
      %c0_3 = arith.constant 0 : index
      %c0_4 = arith.constant 0 : index
      %9 = vector.load %arg7[%c0, %c0_3, %c0_4] : memref<1x8x128xf32, #tpu.memory_space<vmem>>, vector<1x8x128xf32>
      tpu.vector_store %arg7[%c0, %c0_3, %c0_4], %8 {strides = array<i32>} : memref<1x8x128xf32, #tpu.memory_space<vmem>>, vector<1x8x128xf32>,
    } else {
    }
    %3 = arith.index_cast %arg0 : i32 to index
    %4 = memref.load %arg2[%3] : memref<3xi32, #tpu.memory_space<smem>>
    %c0_i32_1 = arith.constant 0 : i32
    %5 = arith.cmpi sgt, %4, %c0_i32_1 : i32
    %6 = arith.extui %5 : i1 to i32
    %c0_i32_2 = arith.constant 0 : i32
    %7 = arith.cmpi ne, %6, %c0_i32_2 : i32
    scf.if %7 {
      %c0 = arith.constant 0 : index
      %c0_3 = arith.constant 0 : index
      %8 = vector.load %arg3[%c0, %c0_3] : memref<64x11xf32, #tpu.memory_space<vmem>>, vector<64x11xf32>
      %9 = vector.extract_strided_slice %8 {offsets = [0, 0], sizes = [64, 1], strides = [1, 1]} : vector<64x11xf32> to vector<64x1xf32>
      %10 = vector.extract_strided_slice %8 {offsets = [0, 1], sizes = [64, 1], strides = [1, 1]} : vector<64x11xf32> to vector<64x1xf32>
      %11 = vector.extract_strided_slice %8 {offsets = [0, 2], sizes = [64, 1], strides = [1, 1]} : vector<64x11xf32> to vector<64x1xf32>
      %12 = vector.extract_strided_slice %8 {offsets = [0, 3], sizes = [64, 1], strides = [1, 1]} : vector<64x11xf32> to vector<64x1xf32>
      %13 = vector.extract_strided_slice %8 {offsets = [0, 4], sizes = [64, 1], strides = [1, 1]} : vector<64x11xf32> to vector<64x1xf32>
      %14 = vector.extract_strided_slice %8 {offsets = [0, 7], sizes = [64, 1], strides = [1, 1]} : vector<64x11xf32> to vector<64x1xf32>
      %15 = vector.extract_strided_slice %8 {offsets = [0, 8], sizes = [64, 1], strides = [1, 1]} : vector<64x11xf32> to vector<64x1xf32>
      %16 = vector.extract_strided_slice %8 {offsets = [0, 9], sizes = [64, 1], strides = [1, 1]} : vector<64x11xf32> to vector<64x1xf32>
      %17 = vector.extract_strided_slice %8 {offsets = [0, 10], sizes = [64, 1], strides = [1, 1]} : vector<64x11xf32> to vector<64x1xf32>
      %c0_4 = arith.constant 0 : index
      %c0_5 = arith.constant 0 : index
      %c0_6 = arith.constant 0 : index
      %18 = vector.load %arg6[%c0_4, %c0_5, %c0_6] : memref<1x5x8xf32, #tpu.memory_space<vmem>>, vector<1x5x8xf32>
      %19 = vector.shape_cast %18 : vector<1x5x8xf32> to vector<5x8xf32>
      %20 = vector.extract_strided_slice %19 {offsets = [0, 0], sizes = [1, 8], strides = [1, 1]} : vector<5x8xf32> to vector<1x8xf32>
      %21 = vector.extract_strided_slice %19 {offsets = [1, 0], sizes = [1, 8], strides = [1, 1]} : vector<5x8xf32> to vector<1x8xf32>
      %22 = vector.extract_strided_slice %19 {offsets = [2, 0], sizes = [1, 8], strides = [1, 1]} : vector<5x8xf32> to vector<1x8xf32>
      %23 = vector.extract_strided_slice %19 {offsets = [3, 0], sizes = [1, 8], strides = [1, 1]} : vector<5x8xf32> to vector<1x8xf32>
      %24 = vector.extract_strided_slice %19 {offsets = [4, 0], sizes = [1, 8], strides = [1, 1]} : vector<5x8xf32> to vector<1x8xf32>
      %cst = arith.constant -1.000000e+00 : f32
      %25 = vector.broadcast %cst : f32 to vector<1x8xf32>
      %26 = arith.cmpf one, %24, %25 : vector<1x8xf32>
      %c64_i32 = arith.constant 64 : i32
      %27 = arith.muli %arg1, %c64_i32 : i32
      %28 = tpu.iota {dimensions = array<i32: 0>} : vector<64x1xi32>
      %29 = vector.broadcast %27 : i32 to vector<64x1xi32>
      %30 = arith.addi %29, %28 : vector<64x1xi32>
      %c128_i32 = arith.constant 128 : i32
      %31 = vector.broadcast %c128_i32 : i32 to vector<64x1xi32>
      %32 = arith.cmpi slt, %30, %31 : vector<64x1xi32>
      %33 = vector.broadcast %11 : vector<64x1xf32> to vector<64x8xf32>
      %34 = vector.broadcast %22 : vector<1x8xf32> to vector<64x8xf32>
      %35 = arith.minimumf %33, %34 : vector<64x8xf32>
      %36 = vector.broadcast %9 : vector<64x1xf32> to vector<64x8xf32>
      %37 = vector.broadcast %20 : vector<1x8xf32> to vector<64x8xf32>
      %38 = arith.maximumf %36, %37 : vector<64x8xf32>
      %39 = arith.subf %35, %38 : vector<64x8xf32>
      %cst_7 = arith.constant 0.000000e+00 : f32
      %40 = vector.broadcast %cst_7 : f32 to vector<64x8xf32>
      %41 = arith.maximumf %39, %40 : vector<64x8xf32>
      %42 = vector.broadcast %12 : vector<64x1xf32> to vector<64x8xf32>
      %43 = vector.broadcast %23 : vector<1x8xf32> to vector<64x8xf32>
      %44 = arith.minimumf %42, %43 : vector<64x8xf32>
      %45 = vector.broadcast %10 : vector<64x1xf32> to vector<64x8xf32>
      %46 = vector.broadcast %21 : vector<1x8xf32> to vector<64x8xf32>
      %47 = arith.maximumf %45, %46 : vector<64x8xf32>
      %48 = arith.subf %44, %47 : vector<64x8xf32>
      %cst_8 = arith.constant 0.000000e+00 : f32
      %49 = vector.broadcast %cst_8 : f32 to vector<64x8xf32>
      %50 = arith.maximumf %48, %49 : vector<64x8xf32>
      %51 = arith.mulf %41, %50 : vector<64x8xf32>
      %52 = arith.subf %22, %20 : vector<1x8xf32>
      %53 = arith.subf %23, %21 : vector<1x8xf32>
      %54 = arith.mulf %52, %53 : vector<1x8xf32>
      %55 = vector.broadcast %13 : vector<64x1xf32> to vector<64x8xf32>
      %56 = vector.broadcast %54 : vector<1x8xf32> to vector<64x8xf32>
      %57 = arith.addf %55, %56 : vector<64x8xf32>
      %58 = arith.subf %57, %51 : vector<64x8xf32>
      %cst_9 = arith.constant 9.99999993E-9 : f32
      %59 = vector.broadcast %cst_9 : f32 to vector<64x8xf32>
      %60 = arith.maximumf %58, %59 : vector<64x8xf32>
      %61 = arith.divf %51, %60 : vector<64x8xf32>
      %cst_10 = arith.constant -1.000000e+00 : f32
      %62 = vector.shape_cast %26 : vector<1x8xi1> to vector<1x8xi1>
      %63 = vector.broadcast %62 : vector<1x8xi1> to vector<64x8xi1>
      %64 = vector.broadcast %cst_10 : f32 to vector<64x8xf32>
      %65 = arith.select %63, %61, %64 : vector<64x8xi1>, vector<64x8xf32>
      %cst_11 = arith.constant dense<0xFF800000> : vector<64xf32>
      %66 = vector.multi_reduction <maximumf>, %65, %cst_11 [1] : vector<64x8xf32> to vector<64xf32>
      %67 = vector.shape_cast %66 : vector<64xf32> to vector<64x1xf32>
      %68 = tpu.iota {dimensions = array<i32: 1>} : vector<64x8xi32>
      %69 = vector.broadcast %67 : vector<64x1xf32> to vector<64x8xf32>
      %70 = arith.cmpf oge, %65, %69 : vector<64x8xf32>
      %c8_i32 = arith.constant 8 : i32
      %71 = vector.broadcast %c8_i32 : i32 to vector<64x8xi32>
      %72 = arith.select %70, %68, %71 : vector<64x8xi1>, vector<64x8xi32>
      %cst_12 = arith.constant dense<2147483647> : vector<64xi32>
      %73 = vector.multi_reduction <minsi>, %72, %cst_12 [1] : vector<64x8xi32> to vector<64xi32>
      %74 = vector.shape_cast %73 : vector<64xi32> to vector<64x1xi32>
      %75 = vector.broadcast %74 : vector<64x1xi32> to vector<64x8xi32>
      %76 = arith.cmpi eq, %68, %75 : vector<64x8xi32>
      %77 = arith.extui %76 : vector<64x8xi1> to vector<64x8xi32>
      %78 = arith.sitofp %77 : vector<64x8xi32> to vector<64x8xf32>
      %79 = vector.broadcast %20 : vector<1x8xf32> to vector<64x8xf32>
      %80 = arith.mulf %78, %79 : vector<64x8xf32>
      %cst_13 = arith.constant dense<0.000000e+00> : vector<64xf32>
      %81 = vector.multi_reduction <add>, %80, %cst_13 [1] : vector<64x8xf32> to vector<64xf32>
      %82 = vector.shape_cast %81 : vector<64xf32> to vector<64x1xf32>
      %83 = vector.broadcast %21 : vector<1x8xf32> to vector<64x8xf32>
      %84 = arith.mulf %78, %83 : vector<64x8xf32>
      %cst_14 = arith.constant dense<0.000000e+00> : vector<64xf32>
      %85 = vector.multi_reduction <add>, %84, %cst_14 [1] : vector<64x8xf32> to vector<64xf32>
      %86 = vector.shape_cast %85 : vector<64xf32> to vector<64x1xf32>
      %87 = vector.broadcast %22 : vector<1x8xf32> to vector<64x8xf32>
      %88 = arith.mulf %78, %87 : vector<64x8xf32>
      %cst_15 = arith.constant dense<0.000000e+00> : vector<64xf32>
      %89 = vector.multi_reduction <add>, %88, %cst_15 [1] : vector<64x8xf32> to vector<64xf32>
      %90 = vector.shape_cast %89 : vector<64xf32> to vector<64x1xf32>
      %91 = vector.broadcast %23 : vector<1x8xf32> to vector<64x8xf32>
      %92 = arith.mulf %78, %91 : vector<64x8xf32>
      %cst_16 = arith.constant dense<0.000000e+00> : vector<64xf32>
      %93 = vector.multi_reduction <add>, %92, %cst_16 [1] : vector<64x8xf32> to vector<64xf32>
      %94 = vector.shape_cast %93 : vector<64xf32> to vector<64x1xf32>
      %95 = vector.broadcast %24 : vector<1x8xf32> to vector<64x8xf32>
      %96 = arith.mulf %78, %95 : vector<64x8xf32>
      %cst_17 = arith.constant dense<0.000000e+00> : vector<64xf32>
      %97 = vector.multi_reduction <add>, %96, %cst_17 [1] : vector<64x8xf32> to vector<64xf32>
      %98 = vector.shape_cast %97 : vector<64xf32> to vector<64x1xf32>
      %cst_18 = arith.constant 5.000000e-01 : f32
      %99 = vector.broadcast %cst_18 : f32 to vector<64x1xf32>
      %100 = arith.cmpf oge, %67, %99 : vector<64x1xf32>
      %101 = arith.andi %100, %32 : vector<64x1xi1>
      %cst_19 = arith.constant 4.000000e-01 : f32
      %102 = vector.broadcast %cst_19 : f32 to vector<64x1xf32>
      %103 = arith.cmpf olt, %67, %102 : vector<64x1xf32>
      %104 = arith.extui %101 : vector<64x1xi1> to vector<64x1xi32>
      %105 = arith.sitofp %104 : vector<64x1xi32> to vector<64x1xf32>
      %106 = vector.shape_cast %105 : vector<64x1xf32> to vector<1x64x1xf32>
      %cst_20 = arith.constant dense<0.000000e+00> : vector<1xf32>
      %107 = vector.multi_reduction <add>, %106, %cst_20 [1, 2] : vector<1x64x1xf32> to vector<1xf32>
      %108 = vector.shape_cast %107 : vector<1xf32> to vector<1x1x1xf32>
      %109 = vector.extract %108[0, 0, 0] : f32 from vector<1x1x1xf32>
      %110 = vector.broadcast %109 : f32 to vector<1x1xf32>
      %c0_21 = arith.constant 0 : index
      %c0_22 = arith.constant 0 : index
      %c0_23 = arith.constant 0 : index
      %111 = vector.load %arg4[%c0_21, %c0_22, %c0_23] : memref<1x64x8xf32, #tpu.memory_space<vmem>>, vector<1x64x8xf32>
      %112 = vector.shape_cast %111 : vector<1x64x8xf32> to vector<64x8xf32>
      %cst_24 = arith.constant 9.99999974E-5 : f32
      %cst_25 = arith.constant 0.999899983 : f32
      %113 = vector.broadcast %cst_24 : f32 to vector<64x8xf32>
      %114 = arith.maximumf %113, %112 : vector<64x8xf32>
      %115 = vector.broadcast %cst_25 : f32 to vector<64x8xf32>
      %116 = arith.minimumf %115, %114 : vector<64x8xf32>
      %117 = tpu.iota {dimensions = array<i32: 1>} : vector<64x8xi32>
      %118 = arith.sitofp %117 : vector<64x8xi32> to vector<64x8xf32>
      %119 = vector.broadcast %98 : vector<64x1xf32> to vector<64x8xf32>
      %120 = arith.cmpf oeq, %118, %119 : vector<64x8xf32>
      %121 = arith.extui %120 : vector<64x8xi1> to vector<64x8xi32>
      %122 = arith.sitofp %121 : vector<64x8xi32> to vector<64x8xf32>
      %cst_26 = arith.constant 0.000000e+00 : f32
      %cst_27 = arith.constant -1.000000e+00 : f32
      %123 = vector.broadcast %cst_26 : f32 to vector<64x1xf32>
      %124 = vector.broadcast %cst_27 : f32 to vector<64x1xf32>
      %125 = arith.select %103, %123, %124 : vector<64x1xi1>, vector<64x1xf32>
      %126 = vector.shape_cast %101 : vector<64x1xi1> to vector<64x1xi1>
      %127 = vector.broadcast %126 : vector<64x1xi1> to vector<64x8xi1>
      %128 = vector.shape_cast %125 : vector<64x1xf32> to vector<64x1xf32>
      %129 = vector.broadcast %128 : vector<64x1xf32> to vector<64x8xf32>
      %130 = arith.select %127, %122, %129 : vector<64x8xi1>, vector<64x8xf32>
      %cst_28 = arith.constant 1.000000e+00 : f32
      %131 = vector.broadcast %cst_28 : f32 to vector<64x8xf32>
      %132 = arith.cmpf oeq, %130, %131 : vector<64x8xf32>
      %cst_29 = arith.constant 1.000000e+00 : f32
      %133 = vector.broadcast %cst_29 : f32 to vector<64x8xf32>
      %134 = arith.subf %133, %116 : vector<64x8xf32>
      %135 = arith.select %132, %116, %134 : vector<64x8xi1>, vector<64x8xf32>
      %cst_30 = arith.constant 1.000000e+00 : f32
      %136 = vector.broadcast %cst_30 : f32 to vector<64x8xf32>
      %137 = arith.subf %136, %116 : vector<64x8xf32>
      %138 = arith.select %132, %137, %116 : vector<64x8xi1>, vector<64x8xf32>
      %cst_31 = arith.constant 2.500000e-01 : f32
      %cst_32 = arith.constant 7.500000e-01 : f32
      %139 = vector.broadcast %cst_31 : f32 to vector<64x8xf32>
      %140 = vector.broadcast %cst_32 : f32 to vector<64x8xf32>
      %141 = arith.select %132, %139, %140 : vector<64x8xi1>, vector<64x8xf32>
      %cst_33 = arith.constant -1.000000e+00 : f32
      %142 = vector.broadcast %cst_33 : f32 to vector<64x8xf32>
      %143 = arith.cmpf one, %130, %142 : vector<64x8xf32>
      %144 = vector.broadcast %32 : vector<64x1xi1> to vector<64x8xi1>
      %145 = arith.andi %143, %144 : vector<64x8xi1>
      %146 = arith.mulf %141, %138 : vector<64x8xf32>
      %147 = arith.mulf %146, %138 : vector<64x8xf32>
      %148 = math.log %135 : vector<64x8xf32>
      %cst_34 = arith.constant 0.000000e+00 : f32
      %149 = vector.broadcast %cst_34 : f32 to vector<64x8xf32>
      %150 = arith.subf %149, %148 : vector<64x8xf32>
      %151 = arith.mulf %147, %150 : vector<64x8xf32>
      %cst_35 = arith.constant 0.000000e+00 : f32
      %152 = vector.broadcast %cst_35 : f32 to vector<64x8xf32>
      %153 = arith.select %145, %151, %152 : vector<64x8xi1>, vector<64x8xf32>
      %154 = vector.shape_cast %153 : vector<64x8xf32> to vector<1x64x8xf32>
      %cst_36 = arith.constant dense<0.000000e+00> : vector<1xf32>
      %155 = vector.multi_reduction <add>, %154, %cst_36 [1, 2] : vector<1x64x8xf32> to vector<1xf32>
      %156 = vector.shape_cast %155 : vector<1xf32> to vector<1x1x1xf32>
      %157 = vector.extract %156[0, 0, 0] : f32 from vector<1x1x1xf32>
      %158 = vector.broadcast %157 : f32 to vector<1x1xf32>
      %159 = arith.subf %90, %82 : vector<64x1xf32>
      %160 = arith.subf %94, %86 : vector<64x1xf32>
      %cst_37 = arith.constant 5.000000e-01 : f32
      %161 = vector.broadcast %cst_37 : f32 to vector<64x1xf32>
      %162 = arith.mulf %161, %159 : vector<64x1xf32>
      %163 = arith.addf %82, %162 : vector<64x1xf32>
      %cst_38 = arith.constant 5.000000e-01 : f32
      %164 = vector.broadcast %cst_38 : f32 to vector<64x1xf32>
      %165 = arith.mulf %164, %160 : vector<64x1xf32>
      %166 = arith.addf %86, %165 : vector<64x1xf32>
      %cst_39 = arith.constant 1.000000e+00 : f32
      %167 = vector.broadcast %cst_39 : f32 to vector<64x1xf32>
      %168 = arith.maximumf %159, %167 : vector<64x1xf32>
      %cst_40 = arith.constant 1.000000e+00 : f32
      %169 = vector.broadcast %cst_40 : f32 to vector<64x1xf32>
      %170 = arith.maximumf %160, %169 : vector<64x1xf32>
      %171 = arith.subf %163, %14 : vector<64x1xf32>
      %172 = arith.mulf %171, %16 : vector<64x1xf32>
      %cst_41 = arith.constant 1.000000e+01 : f32
      %173 = vector.broadcast %cst_41 : f32 to vector<64x1xf32>
      %174 = arith.mulf %172, %173 : vector<64x1xf32>
      %175 = arith.subf %166, %15 : vector<64x1xf32>
      %176 = arith.mulf %175, %17 : vector<64x1xf32>
      %cst_42 = arith.constant 1.000000e+01 : f32
      %177 = vector.broadcast %cst_42 : f32 to vector<64x1xf32>
      %178 = arith.mulf %176, %177 : vector<64x1xf32>
      %179 = arith.mulf %168, %16 : vector<64x1xf32>
      %180 = math.log %179 : vector<64x1xf32>
      %cst_43 = arith.constant 5.000000e+00 : f32
      %181 = vector.broadcast %cst_43 : f32 to vector<64x1xf32>
      %182 = arith.mulf %180, %181 : vector<64x1xf32>
      %183 = arith.mulf %170, %17 : vector<64x1xf32>
      %184 = math.log %183 : vector<64x1xf32>
      %cst_44 = arith.constant 5.000000e+00 : f32
      %185 = vector.broadcast %cst_44 : f32 to vector<64x1xf32>
      %186 = arith.mulf %184, %185 : vector<64x1xf32>
      %c0_45 = arith.constant 0 : index
      %c0_46 = arith.constant 0 : index
      %c0_47 = arith.constant 0 : index
      %187 = vector.load %arg5[%c0_45, %c0_46, %c0_47] : memref<1x64x4xf32, #tpu.memory_space<vmem>>, vector<1x64x4xf32>
      %188 = vector.shape_cast %187 : vector<1x64x4xf32> to vector<64x4xf32>
      %189 = vector.extract_strided_slice %188 {offsets = [0, 0], sizes = [64, 1], strides = [1, 1]} : vector<64x4xf32> to vector<64x1xf32>
      %190 = arith.subf %174, %189 : vector<64x1xf32>
      %191 = math.absf %190 : vector<64x1xf32>
      %cst_48 = arith.constant 0.111111112 : f32
      %192 = vector.broadcast %cst_48 : f32 to vector<64x1xf32>
      %193 = arith.cmpf ole, %191, %192 : vector<64x1xf32>
      %cst_49 = arith.constant 4.500000e+00 : f32
      %194 = vector.broadcast %cst_49 : f32 to vector<64x1xf32>
      %195 = arith.mulf %194, %191 : vector<64x1xf32>
      %196 = arith.mulf %195, %191 : vector<64x1xf32>
      %cst_50 = arith.constant 0.055555556 : f32
      %197 = vector.broadcast %cst_50 : f32 to vector<64x1xf32>
      %198 = arith.subf %191, %197 : vector<64x1xf32>
      %199 = arith.select %193, %196, %198 : vector<64x1xi1>, vector<64x1xf32>
      %cst_51 = arith.constant 0.000000e+00 : f32
      %200 = vector.broadcast %cst_51 : f32 to vector<64x1xf32>
      %201 = arith.select %101, %199, %200 : vector<64x1xi1>, vector<64x1xf32>
      %202 = vector.shape_cast %201 : vector<64x1xf32> to vector<1x64x1xf32>
      %cst_52 = arith.constant dense<0.000000e+00> : vector<1xf32>
      %203 = vector.multi_reduction <add>, %202, %cst_52 [1, 2] : vector<1x64x1xf32> to vector<1xf32>
      %204 = vector.shape_cast %203 : vector<1xf32> to vector<1x1x1xf32>
      %205 = vector.extract %204[0, 0, 0] : f32 from vector<1x1x1xf32>
      %206 = vector.broadcast %205 : f32 to vector<1x1xf32>
      %207 = vector.extract_strided_slice %188 {offsets = [0, 1], sizes = [64, 1], strides = [1, 1]} : vector<64x4xf32> to vector<64x1xf32>
      %208 = arith.subf %178, %207 : vector<64x1xf32>
      %209 = math.absf %208 : vector<64x1xf32>
      %cst_53 = arith.constant 0.111111112 : f32
      %210 = vector.broadcast %cst_53 : f32 to vector<64x1xf32>
      %211 = arith.cmpf ole, %209, %210 : vector<64x1xf32>
      %cst_54 = arith.constant 4.500000e+00 : f32
      %212 = vector.broadcast %cst_54 : f32 to vector<64x1xf32>
      %213 = arith.mulf %212, %209 : vector<64x1xf32>
      %214 = arith.mulf %213, %209 : vector<64x1xf32>
      %cst_55 = arith.constant 0.055555556 : f32
      %215 = vector.broadcast %cst_55 : f32 to vector<64x1xf32>
      %216 = arith.subf %209, %215 : vector<64x1xf32>
      %217 = arith.select %211, %214, %216 : vector<64x1xi1>, vector<64x1xf32>
      %cst_56 = arith.constant 0.000000e+00 : f32
      %218 = vector.broadcast %cst_56 : f32 to vector<64x1xf32>
      %219 = arith.select %101, %217, %218 : vector<64x1xi1>, vector<64x1xf32>
      %220 = vector.shape_cast %219 : vector<64x1xf32> to vector<1x64x1xf32>
      %cst_57 = arith.constant dense<0.000000e+00> : vector<1xf32>
      %221 = vector.multi_reduction <add>, %220, %cst_57 [1, 2] : vector<1x64x1xf32> to vector<1xf32>
      %222 = vector.shape_cast %221 : vector<1xf32> to vector<1x1x1xf32>
      %223 = vector.extract %222[0, 0, 0] : f32 from vector<1x1x1xf32>
      %224 = vector.broadcast %223 : f32 to vector<1x1xf32>
      %225 = arith.addf %206, %224 : vector<1x1xf32>
      %226 = vector.extract_strided_slice %188 {offsets = [0, 2], sizes = [64, 1], strides = [1, 1]} : vector<64x4xf32> to vector<64x1xf32>
      %227 = arith.subf %182, %226 : vector<64x1xf32>
      %228 = math.absf %227 : vector<64x1xf32>
      %cst_58 = arith.constant 0.111111112 : f32
      %229 = vector.broadcast %cst_58 : f32 to vector<64x1xf32>
      %230 = arith.cmpf ole, %228, %229 : vector<64x1xf32>
      %cst_59 = arith.constant 4.500000e+00 : f32
      %231 = vector.broadcast %cst_59 : f32 to vector<64x1xf32>
      %232 = arith.mulf %231, %228 : vector<64x1xf32>
      %233 = arith.mulf %232, %228 : vector<64x1xf32>
      %cst_60 = arith.constant 0.055555556 : f32
      %234 = vector.broadcast %cst_60 : f32 to vector<64x1xf32>
      %235 = arith.subf %228, %234 : vector<64x1xf32>
      %236 = arith.select %230, %233, %235 : vector<64x1xi1>, vector<64x1xf32>
      %cst_61 = arith.constant 0.000000e+00 : f32
      %237 = vector.broadcast %cst_61 : f32 to vector<64x1xf32>
      %238 = arith.select %101, %236, %237 : vector<64x1xi1>, vector<64x1xf32>
      %239 = vector.shape_cast %238 : vector<64x1xf32> to vector<1x64x1xf32>
      %cst_62 = arith.constant dense<0.000000e+00> : vector<1xf32>
      %240 = vector.multi_reduction <add>, %239, %cst_62 [1, 2] : vector<1x64x1xf32> to vector<1xf32>
      %241 = vector.shape_cast %240 : vector<1xf32> to vector<1x1x1xf32>
      %242 = vector.extract %241[0, 0, 0] : f32 from vector<1x1x1xf32>
      %243 = vector.broadcast %242 : f32 to vector<1x1xf32>
      %244 = arith.addf %225, %243 : vector<1x1xf32>
      %245 = vector.extract_strided_slice %188 {offsets = [0, 3], sizes = [64, 1], strides = [1, 1]} : vector<64x4xf32> to vector<64x1xf32>
      %246 = arith.subf %186, %245 : vector<64x1xf32>
      %247 = math.absf %246 : vector<64x1xf32>
      %cst_63 = arith.constant 0.111111112 : f32
      %248 = vector.broadcast %cst_63 : f32 to vector<64x1xf32>
      %249 = arith.cmpf ole, %247, %248 : vector<64x1xf32>
      %cst_64 = arith.constant 4.500000e+00 : f32
      %250 = vector.broadcast %cst_64 : f32 to vector<64x1xf32>
      %251 = arith.mulf %250, %247 : vector<64x1xf32>
      %252 = arith.mulf %251, %247 : vector<64x1xf32>
      %cst_65 = arith.constant 0.055555556 : f32
      %253 = vector.broadcast %cst_65 : f32 to vector<64x1xf32>
      %254 = arith.subf %247, %253 : vector<64x1xf32>
      %255 = arith.select %249, %252, %254 : vector<64x1xi1>, vector<64x1xf32>
      %cst_66 = arith.constant 0.000000e+00 : f32
      %256 = vector.broadcast %cst_66 : f32 to vector<64x1xf32>
      %257 = arith.select %101, %255, %256 : vector<64x1xi1>, vector<64x1xf32>
      %258 = vector.shape_cast %257 : vector<64x1xf32> to vector<1x64x1xf32>
      %cst_67 = arith.constant dense<0.000000e+00> : vector<1xf32>
      %259 = vector.multi_reduction <add>, %258, %cst_67 [1, 2] : vector<1x64x1xf32> to vector<1xf32>
      %260 = vector.shape_cast %259 : vector<1xf32> to vector<1x1x1xf32>
      %261 = vector.extract %260[0, 0, 0] : f32 from vector<1x1x1xf32>
      %262 = vector.broadcast %261 : f32 to vector<1x1xf32>
      %263 = arith.addf %244, %262 : vector<1x1xf32>
      %264 = tpu.iota {dimensions = array<i32: 0>} : vector<8x128xi32>
      %c0_i32_68 = arith.constant 0 : i32
      %265 = vector.broadcast %c0_i32_68 : i32 to vector<8x128xi32>
      %266 = arith.cmpi eq, %264, %265 : vector<8x128xi32>
      %c1_i32 = arith.constant 1 : i32
      %267 = vector.broadcast %c1_i32 : i32 to vector<8x128xi32>
      %268 = arith.cmpi eq, %264, %267 : vector<8x128xi32>
      %c2_i32 = arith.constant 2 : i32
      %269 = vector.broadcast %c2_i32 : i32 to vector<8x128xi32>
      %270 = arith.cmpi eq, %264, %269 : vector<8x128xi32>
      %cst_69 = arith.constant 0.000000e+00 : f32
      %271 = vector.shape_cast %110 : vector<1x1xf32> to vector<1x1xf32>
      %272 = vector.broadcast %271 : vector<1x1xf32> to vector<8x128xf32>
      %273 = vector.broadcast %cst_69 : f32 to vector<8x128xf32>
      %274 = arith.select %270, %272, %273 : vector<8x128xi1>, vector<8x128xf32>
      %275 = vector.shape_cast %263 : vector<1x1xf32> to vector<1x1xf32>
      %276 = vector.broadcast %275 : vector<1x1xf32> to vector<8x128xf32>
      %277 = arith.select %268, %276, %274 : vector<8x128xi1>, vector<8x128xf32>
      %278 = vector.shape_cast %158 : vector<1x1xf32> to vector<1x1xf32>
      %279 = vector.broadcast %278 : vector<1x1xf32> to vector<8x128xf32>
      %280 = arith.select %266, %279, %277 : vector<8x128xi1>, vector<8x128xf32>
      %c0_70 = arith.constant 0 : index
      %c0_71 = arith.constant 0 : index
      %c0_72 = arith.constant 0 : index
      %281 = vector.load %arg7[%c0_70, %c0_71, %c0_72] : memref<1x8x128xf32, #tpu.memory_space<vmem>>, vector<1x8x128xf32>
      %282 = vector.shape_cast %281 : vector<1x8x128xf32> to vector<8x128xf32>
      %283 = arith.addf %282, %280 : vector<8x128xf32>
      %c0_73 = arith.constant 0 : index
      %c0_74 = arith.constant 0 : index
      %c0_75 = arith.constant 0 : index
      %284 = vector.load %arg7[%c0_73, %c0_74, %c0_75] : memref<1x8x128xf32, #tpu.memory_space<vmem>>, vector<1x8x128xf32>
      %285 = vector.shape_cast %284 : vector<1x8x128xf32> to vector<8x128xf32>
      %286 = vector.shape_cast %283 : vector<8x128xf32> to vector<1x8x128xf32>
      tpu.vector_store %arg7[%c0_73, %c0_74, %c0_75], %286 {strides = array<i32>} : memref<1x8x128xf32, #tpu.memory_space<vmem>>, vector<1x8x128xf32>,
    } else {
    }
    return
  }
  func.func @transform_0(%arg0: i32, %arg1: i32, %arg2: memref<3xi32, #tpu.memory_space<smem>>) -> (i32, i32) {
    %c0_i32 = arith.constant 0 : i32
    %c0_i32_0 = arith.constant 0 : i32
    return %arg1, %c0_i32 : i32, i32
  }
  func.func @transform_1(%arg0: i32, %arg1: i32, %arg2: memref<3xi32, #tpu.memory_space<smem>>) -> (i32, i32, i32) {
    %c0_i32 = arith.constant 0 : i32
    %c0_i32_0 = arith.constant 0 : i32
    return %arg0, %arg1, %c0_i32 : i32, i32, i32
  }
  func.func @transform_2(%arg0: i32, %arg1: i32, %arg2: memref<3xi32, #tpu.memory_space<smem>>) -> (i32, i32, i32) {
    %c0_i32 = arith.constant 0 : i32
    %c0_i32_0 = arith.constant 0 : i32
    return %arg0, %arg1, %c0_i32 : i32, i32, i32
  }
  func.func @transform_3(%arg0: i32, %arg1: i32, %arg2: memref<3xi32, #tpu.memory_space<smem>>) -> (i32, i32, i32) {
    %c0_i32 = arith.constant 0 : i32
    %c0_i32_0 = arith.constant 0 : i32
    %c0_i32_1 = arith.constant 0 : i32
    return %arg0, %c0_i32, %c0_i32_0 : i32, i32, i32
  }
  func.func @transform_4(%arg0: i32, %arg1: i32, %arg2: memref<3xi32, #tpu.memory_space<smem>>) -> (i32, i32, i32) {
    %c0_i32 = arith.constant 0 : i32
    %c0_i32_0 = arith.constant 0 : i32
    %c0_i32_1 = arith.constant 0 : i32
    return %arg0, %c0_i32, %c0_i32_0 : i32, i32, i32
  }
}

</mosaic_0001>

<llo_original>
// kernel: focal_loss.1
$region0: #{focal_loss.1}
  #allocation0 [shape = 'u32[]', space=smem, size = 0x4, offset = 0x4, fixed_abs, tag = 'smem constant byte address 0x4 - core index']
  #allocation1 [shape = 'u32[144,128]{1,0:T(1,128)}', space=vmem, size = 0x12000, scoped, tag = 'internal scratch']
  #allocation2 [shape = 's32[1]{0}', space=sflag, size = 0x4, scoped, tag = 'scoped memory for focal_loss.1']
  #allocation3 [shape = 'u8[512]{0}', space=smem, size = 0x200, scoped, tag = 'prefetched SMEM operand 0']
  %s0 = inlined_call_operand.vmem [shape: s32[3], index: 0, kind: input, shape index: {}]
  %s1 = inlined_call_operand.vmem [shape: f32[128,11], index: 1, kind: input, shape index: {}]
  %s2 = inlined_call_operand.vmem [shape: f32[3,128,8], index: 2, kind: input, shape index: {}]
  %s3 = inlined_call_operand.vmem [shape: f32[3,128,4], index: 3, kind: input, shape index: {}]
  %s4 = inlined_call_operand.vmem [shape: f32[3,5,8], index: 4, kind: input, shape index: {}]
  %s5 = inlined_call_operand.vmem [shape: f32[3,8,128], index: 5, kind: output, shape index: {}]
  %s6 = sld [smem:[#allocation0]]
  $region57: #{focal_loss.1} parent=0
    _
  %s8 = ssub.s32 1, %s6
  %s9 = scalar_select 0, %s8, %s6
  %s10 = sshll.u32 %s0, 4
  %s11 = int_to_ptr.vmem [resolvable:$true] %s10
  %13 = dma.vmem_to_smem %s11, 16, [#allocation3], [#allocation2]
  %14 = dma.done [#allocation2], 16
  %15 = sfence
  loop: start=0, step=1, limit=8
  $region2: #{focal_loss.1} parent=0 // loop_pre_header
    _
  $region3: #{focal_loss.1} parent=0 // loop_header
    %s17 = sphi 0, %s21
    %p18 = scmp.ge.s32.totalorder %s17, 8
    %s24 = sphi 0, %s36
    %s25 = sphi 0, %s32
    %s26 = sphi 0, %s24
    %s27 = sphi 0, %s25
    %s28 = sphi 0, %s26
    %s29 = sphi 0, %s27
    %s39 = sphi 0, %s41
    %s42 = sphi 0, %s39
    %s43 = sphi 0, %s42
    %s59 = sphi 0, %s43
    %s67 = sphi 0, %s69
    %s70 = sphi 0, %s67
    %s71 = sphi 0, %s70
    %s87 = sphi 0, %s71
    %s95 = sphi 0, %s97
    %s98 = sphi 0, %s95
    %s99 = sphi 0, %s98
    %s115 = sphi 0, %s99
    %s121 = sphi 0, %s123
    %s124 = sphi 0, %s121
    %s125 = sphi 0, %s124
    %s141 = sphi 0, %s125
    %s147 = sphi 0, %s149
    %s150 = sphi 0, %s147
    %s151 = sphi 0, %s150
    %s167 = sphi 0, %s151
  $region4: #{focal_loss.1} parent=0 // loop_header_branch
    %20 = sbr.rel (%p18) target = $region8
  $region5: #{focal_loss.1} parent=0 // loop_body
    %s22 = ssub.s32 %s17, 1
    %s23 = ssub.s32 %s17, 2
    %s30 = sadd.s32 1, %s25
    %p31 = scmp.ge.s32.totalorder %s30, 2
    %s32 = scalar_select %p31, 0, %s30
    %s33 = sadd.s32 1, %s24
    %s34 = scalar_select %p31, %s33, %s24
    %p35 = scmp.ge.s32.totalorder %s34, 3
    %s36 = scalar_select %p35, 0, %s34
    %s37 = ssub.s32 %s25, %s32
    %p38 = scmp.eq.s32.totalorder %s37, 0
    %s40 = sadd.s32 %s39, 1
    %s41 = scalar_select %p38, %s39, %s40
    %p44 = pneg %p38
    %p45 = scmp.eq.s32.totalorder %s17, 5
    %p46 = por %p44, %p45
    %p47 = scmp.ne.s32.totalorder %s39, %s42
    %p48 = scmp.eq.s32.totalorder %s17, 0
    %p49 = por %p47, %p48
    %p50 = scmp.ne.s32.totalorder %s39, %s42
    %p51 = scmp.eq.s32.totalorder %s22, 5
    %p52 = por %p50, %p51
    %p53 = scmp.ne.s32.totalorder %s42, %s43
    %p54 = scmp.eq.s32.totalorder %s22, 0
    %p55 = por %p53, %p54
    %p56 = scmp.ne.s32.totalorder %s42, %s43
    %p57 = scmp.eq.s32.totalorder %s23, 5
    %p58 = por %p56, %p57
    %p60 = scmp.ne.s32.totalorder %s43, %s59
    %p61 = scmp.eq.s32.totalorder %s23, 0
    %p62 = por %p60, %p61
    %s63 = ssub.s32 %s24, %s36
    %s64 = ssub.s32 %s25, %s32
    %s65 = sor.u32 %s63, %s64
    %p66 = scmp.eq.s32.totalorder %s65, 0
    %s68 = sadd.s32 %s67, 1
    %s69 = scalar_select %p66, %s67, %s68
    %p72 = pneg %p66
    %p73 = scmp.eq.s32.totalorder %s17, 5
    %p74 = por %p72, %p73
    %p75 = scmp.ne.s32.totalorder %s67, %s70
    %p76 = scmp.eq.s32.totalorder %s17, 0
    %p77 = por %p75, %p76
    %p78 = scmp.ne.s32.totalorder %s67, %s70
    %p79 = scmp.eq.s32.totalorder %s22, 5
    %p80 = por %p78, %p79
    %p81 = scmp.ne.s32.totalorder %s70, %s71
    %p82 = scmp.eq.s32.totalorder %s22, 0
    %p83 = por %p81, %p82
    %p84 = scmp.ne.s32.totalorder %s70, %s71
    %p85 = scmp.eq.s32.totalorder %s23, 5
    %p86 = por %p84, %p85
    %p88 = scmp.ne.s32.totalorder %s71, %s87
    %p89 = scmp.eq.s32.totalorder %s23, 0
    %p90 = por %p88, %p89
    %s91 = ssub.s32 %s24, %s36
    %s92 = ssub.s32 %s25, %s32
    %s93 = sor.u32 %s91, %s92
    %p94 = scmp.eq.s32.totalorder %s93, 0
    %s96 = sadd.s32 %s95, 1
    %s97 = scalar_select %p94, %s95, %s96
    %p100 = pneg %p94
    %p101 = scmp.eq.s32.totalorder %s17, 5
    %p102 = por %p100, %p101
    %p103 = scmp.ne.s32.totalorder %s95, %s98
    %p104 = scmp.eq.s32.totalorder %s17, 0
    %p105 = por %p103, %p104
    %p106 = scmp.ne.s32.totalorder %s95, %s98
    %p107 = scmp.eq.s32.totalorder %s22, 5
    %p108 = por %p106, %p107
    %p109 = scmp.ne.s32.totalorder %s98, %s99
    %p110 = scmp.eq.s32.totalorder %s22, 0
    %p111 = por %p109, %p110
    %p112 = scmp.ne.s32.totalorder %s98, %s99
    %p113 = scmp.eq.s32.totalorder %s23, 5
    %p114 = por %p112, %p113
    %p116 = scmp.ne.s32.totalorder %s99, %s115
    %p117 = scmp.eq.s32.totalorder %s23, 0
    %p118 = por %p116, %p117
    %s119 = ssub.s32 %s24, %s36
    %p120 = scmp.eq.s32.totalorder %s119, 0
    %s122 = sadd.s32 %s121, 1
    %s123 = scalar_select %p120, %s121, %s122
    %p126 = pneg %p120
    %p127 = scmp.eq.s32.totalorder %s17, 5
    %p128 = por %p126, %p127
    %p129 = scmp.ne.s32.totalorder %s121, %s124
    %p130 = scmp.eq.s32.totalorder %s17, 0
    %p131 = por %p129, %p130
    %p132 = scmp.ne.s32.totalorder %s121, %s124
    %p133 = scmp.eq.s32.totalorder %s22, 5
    %p134 = por %p132, %p133
    %p135 = scmp.ne.s32.totalorder %s124, %s125
    %p136 = scmp.eq.s32.totalorder %s22, 0
    %p137 = por %p135, %p136
    %p138 = scmp.ne.s32.totalorder %s124, %s125
    %p139 = scmp.eq.s32.totalorder %s23, 5
    %p140 = por %p138, %p139
    %p142 = scmp.ne.s32.totalorder %s125, %s141
    %p143 = scmp.eq.s32.totalorder %s23, 0
    %p144 = por %p142, %p143
    %s145 = ssub.s32 %s24, %s36
    %p146 = scmp.eq.s32.totalorder %s145, 0
    %s148 = sadd.s32 %s147, 1
    %s149 = scalar_select %p146, %s147, %s148
    %p152 = pneg %p146
    %p153 = scmp.eq.s32.totalorder %s17, 5
    %p154 = por %p152, %p153
    %p155 = scmp.ne.s32.totalorder %s147, %s150
    %p156 = scmp.eq.s32.totalorder %s17, 0
    %p157 = por %p155, %p156
    %p158 = scmp.ne.s32.totalorder %s147, %s150
    %p159 = scmp.eq.s32.totalorder %s22, 5
    %p160 = por %p158, %p159
    %p161 = scmp.ne.s32.totalorder %s150, %s151
    %p162 = scmp.eq.s32.totalorder %s22, 0
    %p163 = por %p161, %p162
    %p164 = scmp.ne.s32.totalorder %s150, %s151
    %p165 = scmp.eq.s32.totalorder %s23, 5
    %p166 = por %p164, %p165
    %p168 = scmp.ne.s32.totalorder %s151, %s167
    %p169 = scmp.eq.s32.totalorder %s23, 0
    %p170 = por %p168, %p169
    %p171 = scmp.le.s32.totalorder 1, %s17
    %p172 = scmp.lt.s32.totalorder %s17, 7
    %p173 = pnand %p171, %p172
    %p174 = pneg %p173
    // Predicated region
    $region9: #{focal_loss.1} parent=5 // pred_check
      _
    $region10: #{focal_loss.1} parent=5 // pred_check_branch
      %176 = sbr.rel (%p173) target = $region12
    $region11: #{focal_loss.1} parent=5 // pred_region
      %s177 = ssub.s32 %s17, 1
    $region12: #{focal_loss.1} parent=5 // pred_fallthru
      _
    %p178 = scmp.lt.s32.totalorder %s17, 6
    // Predicated region
    $region13: #{focal_loss.1} parent=5 // pred_check
      %p179 = pneg %p178
    $region14: #{focal_loss.1} parent=5 // pred_check_branch
      %181 = sbr.rel (%p179) target = $region16
    $region15: #{focal_loss.1} parent=5 // pred_region
      // Predicated region
      $region17: #{focal_loss.1} parent=15 // pred_check
        %p182 = pneg %p49
      $region18: #{focal_loss.1} parent=15 // pred_check_branch
        %184 = sbr.rel (%p182) target = $region20
      $region19: #{focal_loss.1} parent=15 // pred_region
        %s185 = smul.u32 8, %s25
        %p186 = scmp.lt.s32.totalorder %s185, 15
        %s187 = scalar_select %p186, %s185, 15
        %s188 = smul.addr %s187, 8
        %s189 = scalar_lea.vmem %s1, %s188
        %s190 = smul.u32 8, %s25
      $region20: #{focal_loss.1} parent=15 // pred_fallthru
        _
      // Predicated region
      $region21: #{focal_loss.1} parent=15 // pred_check
        %p191 = pneg %p77
      $region22: #{focal_loss.1} parent=15 // pred_check_branch
        %193 = sbr.rel (%p191) target = $region24
      $region23: #{focal_loss.1} parent=15 // pred_region
        %s194 = smul.u32 8, %s25
        %p195 = scmp.lt.s32.totalorder %s24, 2
        %s196 = scalar_select %p195, %s24, 2
        %p197 = scmp.lt.s32.totalorder %s194, 15
        %s198 = scalar_select %p197, %s194, 15
        %s199 = smul.addr %s196, 16
        %s200 = sadd.s32 %s198, %s199
        %s201 = smul.addr %s200, 8
        %s202 = scalar_lea.vmem %s2, %s201
        %s203 = smul.u32 8, %s25
      $region24: #{focal_loss.1} parent=15 // pred_fallthru
        _
      // Predicated region
      $region25: #{focal_loss.1} parent=15 // pred_check
        %p204 = pneg %p105
      $region26: #{focal_loss.1} parent=15 // pred_check_branch
        %206 = sbr.rel (%p204) target = $region28
      $region27: #{focal_loss.1} parent=15 // pred_region
        %s207 = smul.u32 8, %s25
        %p208 = scmp.lt.s32.totalorder %s24, 2
        %s209 = scalar_select %p208, %s24, 2
        %p210 = scmp.lt.s32.totalorder %s207, 15
        %s211 = scalar_select %p210, %s207, 15
        %s212 = smul.addr %s209, 16
        %s213 = sadd.s32 %s211, %s212
        %s214 = smul.addr %s213, 8
        %s215 = scalar_lea.vmem %s3, %s214
        %s216 = smul.u32 8, %s25
      $region28: #{focal_loss.1} parent=15 // pred_fallthru
        _
      // Predicated region
      $region29: #{focal_loss.1} parent=15 // pred_check
        %p217 = pneg %p131
      $region30: #{focal_loss.1} parent=15 // pred_check_branch
        %219 = sbr.rel (%p217) target = $region32
      $region31: #{focal_loss.1} parent=15 // pred_region
        %p220 = scmp.lt.s32.totalorder %s24, 2
        %s221 = scalar_select %p220, %s24, 2
        %s222 = smul.addr %s221, 8
        %s223 = scalar_lea.vmem %s4, %s222
      $region32: #{focal_loss.1} parent=15 // pred_fallthru
        _
    $region16: #{focal_loss.1} parent=5 // pred_fallthru
      _
    %p224 = scmp.le.s32.totalorder 1, %s17
    %p225 = scmp.lt.s32.totalorder %s17, 7
    %p226 = pnand %p224, %p225
    %p227 = pneg %p226
    // Predicated region
    $region33: #{focal_loss.1} parent=5 // pred_check
      _
    $region34: #{focal_loss.1} parent=5 // pred_check_branch
      %229 = sbr.rel (%p226) target = $region36
    $region35: #{focal_loss.1} parent=5 // pred_region
      %s230 = ssub.s32 %s17, 1
      %s231 = smul.u32 8, %s27
      %p232 = scmp.lt.s32.totalorder %s231, 15
      %s233 = scalar_select %p232, %s231, 15
      %s234 = smul.addr %s233, 8
      %s235 = scalar_lea.vmem %s1, %s234
      %p236 = pneg %p55
      %p237 = pneg %p52
      %s238 = smul.u32 8, %s27
      %p239 = scmp.lt.s32.totalorder %s26, 2
      %s240 = scalar_select %p239, %s26, 2
      %p241 = scmp.lt.s32.totalorder %s238, 15
      %s242 = scalar_select %p241, %s238, 15
      %s243 = smul.addr %s240, 16
      %s244 = sadd.s32 %s242, %s243
      %s245 = smul.addr %s244, 8
      %s246 = scalar_lea.vmem %s2, %s245
      %p247 = pneg %p83
      %p248 = pneg %p80
      %s249 = smul.u32 8, %s27
      %p250 = scmp.lt.s32.totalorder %s26, 2
      %s251 = scalar_select %p250, %s26, 2
      %p252 = scmp.lt.s32.totalorder %s249, 15
      %s253 = scalar_select %p252, %s249, 15
      %s254 = smul.addr %s251, 16
      %s255 = sadd.s32 %s253, %s254
      %s256 = smul.addr %s255, 8
      %s257 = scalar_lea.vmem %s3, %s256
      %p258 = pneg %p111
      %p259 = pneg %p108
      %p260 = scmp.lt.s32.totalorder %s26, 2
      %s261 = scalar_select %p260, %s26, 2
      %s262 = smul.addr %s261, 8
      %s263 = scalar_lea.vmem %s4, %s262
      %p264 = pneg %p137
      %p265 = pneg %p134
      %p266 = pneg %p163
      %p267 = pneg %p160
      %p268 = scmp.lt.s32.totalorder %s26, 2
      %s269 = scalar_select %p268, %s26, 2
      %s270 = smul.addr %s269, 8
      %s271 = scalar_lea.vmem %s5, %s270
      %s272 = smul.u32 8, %s27
      %p273 = scmp.lt.s32.totalorder %s272, 15
      %s274 = scalar_select %p273, %s272, 15
      %s275 = smul.addr %s274, 8
      %s276 = scalar_lea.vmem %s1, %s275
      %s277 = smul.u32 8, %s27
      %s278 = smul.u32 8, %s27
      %p279 = scmp.lt.s32.totalorder %s26, 2
      %s280 = scalar_select %p279, %s26, 2
      %p281 = scmp.lt.s32.totalorder %s278, 15
      %s282 = scalar_select %p281, %s278, 15
      %s283 = smul.addr %s280, 16
      %s284 = sadd.s32 %s282, %s283
      %s285 = smul.addr %s284, 8
      %s286 = scalar_lea.vmem %s2, %s285
      %s287 = smul.u32 8, %s27
      %s288 = smul.u32 8, %s27
      %p289 = scmp.lt.s32.totalorder %s26, 2
      %s290 = scalar_select %p289, %s26, 2
      %p291 = scmp.lt.s32.totalorder %s288, 15
      %s292 = scalar_select %p291, %s288, 15
      %s293 = smul.addr %s290, 16
      %s294 = sadd.s32 %s292, %s293
      %s295 = smul.addr %s294, 8
      %s296 = scalar_lea.vmem %s3, %s295
      %s297 = smul.u32 8, %s27
      %p298 = scmp.lt.s32.totalorder %s26, 2
      %s299 = scalar_select %p298, %s26, 2
      %s300 = smul.addr %s299, 8
      %s301 = scalar_lea.vmem %s4, %s300
      %p302 = scmp.lt.s32.totalorder %s26, 2
      %s303 = scalar_select %p302, %s26, 2
      %s304 = smul.addr %s303, 8
      %s305 = scalar_lea.vmem %s5, %s304
      %p306 = scmp.eq.s32.totalorder %s27, 0
      // Predicated region
      $region37: #{focal_loss.1} parent=35 // pred_check
        %p307 = pneg %p306
      $region38: #{focal_loss.1} parent=35 // pred_check_branch
        %309 = sbr.rel (%p307) target = $region40
      $region39: #{focal_loss.1} parent=35 // pred_region
        %310 = vst [vmem:[%s305] sm:$0xff] 0.0
      $region40: #{focal_loss.1} parent=35 // pred_fallthru
        _
      %s311 = sld [smem:[#allocation3 + %s26]]
      %p312 = scmp.gt.s32.totalorder %s311, 0
      // Predicated region
      $region41: #{focal_loss.1} parent=35 // pred_check
        %p313 = pneg %p312
      $region42: #{focal_loss.1} parent=35 // pred_check_branch
        %315 = sbr.rel (%p313) target = $region44
      $region43: #{focal_loss.1} parent=35 // pred_region
        %v316 = vld [vmem:[%s276] sm:$0xff]
        %v317 = vld [vmem:[%s276 + $0x8] sm:$0xff]
        %v318 = vld [vmem:[%s276 + $0x10] sm:$0xff]
        %v319 = vld [vmem:[%s276 + $0x18] sm:$0xff]
        %v320 = vld [vmem:[%s276 + $0x20] sm:$0xff]
        %v321 = vld [vmem:[%s276 + $0x28] sm:$0xff]
        %v322 = vld [vmem:[%s276 + $0x30] sm:$0xff]
        %v323 = vld [vmem:[%s276 + $0x38] sm:$0xff]
        %v324 = vld [vmem:[%s301] sm:$0x1f]
        %vm325 = vcmp.ne.f32.partialorder %v324, -1.0
        %s326 = smul.u32 %s27, 64
        %v327 = vlaneseq
        %v328 = vshrl.u32 %v327, 7
        %v329 = vadd.s32 %v328, 8
        %v330 = vadd.s32 %v328, 16
        %v331 = vadd.s32 %v328, 24
        %v332 = vadd.s32 %v328, 32
        %v333 = vadd.s32 %v328, 40
        %v334 = vadd.s32 %v328, 48
        %v335 = vadd.s32 %v328, 56
        %v336 = vstv %s326
        %v337 = vadd.s32 %v336, %v328
        %v338 = vadd.s32 %v336, %v329
        %v339 = vadd.s32 %v336, %v330
        %v340 = vadd.s32 %v336, %v331
        %v341 = vadd.s32 %v336, %v332
        %v342 = vadd.s32 %v336, %v333
        %v343 = vadd.s32 %v336, %v334
        %v344 = vadd.s32 %v336, %v335
        %vm345 = vcmp.lt.s32.totalorder %v337, 128
        %vm346 = vcmp.lt.s32.totalorder %v338, 128
        %vm347 = vcmp.lt.s32.totalorder %v339, 128
        %vm348 = vcmp.lt.s32.totalorder %v340, 128
        %vm349 = vcmp.lt.s32.totalorder %v341, 128
        %vm350 = vcmp.lt.s32.totalorder %v342, 128
        %vm351 = vcmp.lt.s32.totalorder %v343, 128
        %vm352 = vcmp.lt.s32.totalorder %v344, 128
        %354 = vset.pattern.permute.xlu0 2
        %355 = vperm.xlu0 %354, %v316
        %v356 = vpop.permute.xlu0 %355
        %359 = vset.pattern.permute.xlu0 2
        %360 = vperm.xlu0 %359, %v317
        %v361 = vpop.permute.xlu0 %360
        %364 = vset.pattern.permute.xlu0 2
        %365 = vperm.xlu0 %364, %v318
        %v366 = vpop.permute.xlu0 %365
        %369 = vset.pattern.permute.xlu0 2
        %370 = vperm.xlu0 %369, %v319
        %v371 = vpop.permute.xlu0 %370
        %374 = vset.pattern.permute.xlu0 2
        %375 = vperm.xlu0 %374, %v320
        %v376 = vpop.permute.xlu0 %375
        %379 = vset.pattern.permute.xlu0 2
        %380 = vperm.xlu0 %379, %v321
        %v381 = vpop.permute.xlu0 %380
        %384 = vset.pattern.permute.xlu0 2
        %385 = vperm.xlu0 %384, %v322
        %v386 = vpop.permute.xlu0 %385
        %389 = vset.pattern.permute.xlu0 2
        %390 = vperm.xlu0 %389, %v323
        %v391 = vpop.permute.xlu0 %390
        %v393 = vlaneseq
        %v394 = vshrl.u32 %v393, 7
        %v395 = vsub.s32 2, %v394
        %v396 = vrot.slane %v324, %v395
        %v397 = vmin.f32 %v356, %v396
        %v398 = vmin.f32 %v361, %v396
        %v399 = vmin.f32 %v366, %v396
        %v400 = vmin.f32 %v371, %v396
        %v401 = vmin.f32 %v376, %v396
        %v402 = vmin.f32 %v381, %v396
        %v403 = vmin.f32 %v386, %v396
        %v404 = vmin.f32 %v391, %v396
        %405 = vset.pattern.permute.xlu0 0
        %406 = vperm.xlu0 %405, %v316
        %v407 = vpop.permute.xlu0 %406
        %409 = vset.pattern.permute.xlu0 0
        %410 = vperm.xlu0 %409, %v317
        %v411 = vpop.permute.xlu0 %410
        %413 = vset.pattern.permute.xlu0 0
        %414 = vperm.xlu0 %413, %v318
        %v415 = vpop.permute.xlu0 %414
        %417 = vset.pattern.permute.xlu0 0
        %418 = vperm.xlu0 %417, %v319
        %v419 = vpop.permute.xlu0 %418
        %421 = vset.pattern.permute.xlu0 0
        %422 = vperm.xlu0 %421, %v320
        %v423 = vpop.permute.xlu0 %422
        %425 = vset.pattern.permute.xlu0 0
        %426 = vperm.xlu0 %425, %v321
        %v427 = vpop.permute.xlu0 %426
        %429 = vset.pattern.permute.xlu0 0
        %430 = vperm.xlu0 %429, %v322
        %v431 = vpop.permute.xlu0 %430
        %433 = vset.pattern.permute.xlu0 0
        %434 = vperm.xlu0 %433, %v323
        %v435 = vpop.permute.xlu0 %434
        %v437 = vlaneseq
        %v438 = vshrl.u32 %v437, 7
        %v439 = vsub.s32 0, %v438
        %v440 = vrot.slane %v324, %v439
        %v441 = vmax.f32 %v407, %v440
        %v442 = vmax.f32 %v411, %v440
        %v443 = vmax.f32 %v415, %v440
        %v444 = vmax.f32 %v419, %v440
        %v445 = vmax.f32 %v423, %v440
        %v446 = vmax.f32 %v427, %v440
        %v447 = vmax.f32 %v431, %v440
        %v448 = vmax.f32 %v435, %v440
        %v449 = vsub.f32 %v397, %v441
        %v450 = vsub.f32 %v398, %v442
        %v451 = vsub.f32 %v399, %v443
        %v452 = vsub.f32 %v400, %v444
        %v453 = vsub.f32 %v401, %v445
        %v454 = vsub.f32 %v402, %v446
        %v455 = vsub.f32 %v403, %v447
        %v456 = vsub.f32 %v404, %v448
        %v457 = vmax.f32 %v449, 0.0
        %v458 = vmax.f32 %v450, 0.0
        %v459 = vmax.f32 %v451, 0.0
        %v460 = vmax.f32 %v452, 0.0
        %v461 = vmax.f32 %v453, 0.0
        %v462 = vmax.f32 %v454, 0.0
        %v463 = vmax.f32 %v455, 0.0
        %v464 = vmax.f32 %v456, 0.0
        %465 = vset.pattern.permute.xlu0 3
        %466 = vperm.xlu0 %465, %v316
        %v467 = vpop.permute.xlu0 %466
        %469 = vset.pattern.permute.xlu0 3
        %470 = vperm.xlu0 %469, %v317
        %v471 = vpop.permute.xlu0 %470
        %473 = vset.pattern.permute.xlu0 3
        %474 = vperm.xlu0 %473, %v318
        %v475 = vpop.permute.xlu0 %474
        %477 = vset.pattern.permute.xlu0 3
        %478 = vperm.xlu0 %477, %v319
        %v479 = vpop.permute.xlu0 %478
        %481 = vset.pattern.permute.xlu0 3
        %482 = vperm.xlu0 %481, %v320
        %v483 = vpop.permute.xlu0 %482
        %485 = vset.pattern.permute.xlu0 3
        %486 = vperm.xlu0 %485, %v321
        %v487 = vpop.permute.xlu0 %486
        %489 = vset.pattern.permute.xlu0 3
        %490 = vperm.xlu0 %489, %v322
        %v491 = vpop.permute.xlu0 %490
        %493 = vset.pattern.permute.xlu0 3
        %494 = vperm.xlu0 %493, %v323
        %v495 = vpop.permute.xlu0 %494
        %v497 = vlaneseq
        %v498 = vshrl.u32 %v497, 7
        %v499 = vsub.s32 3, %v498
        %v500 = vrot.slane %v324, %v499
        %v501 = vmin.f32 %v467, %v500
        %v502 = vmin.f32 %v471, %v500
        %v503 = vmin.f32 %v475, %v500
        %v504 = vmin.f32 %v479, %v500
        %v505 = vmin.f32 %v483, %v500
        %v506 = vmin.f32 %v487, %v500
        %v507 = vmin.f32 %v491, %v500
        %v508 = vmin.f32 %v495, %v500
        %509 = vset.pattern.permute.xlu0 1
        %510 = vperm.xlu0 %509, %v316
        %v511 = vpop.permute.xlu0 %510
        %513 = vset.pattern.permute.xlu0 1
        %514 = vperm.xlu0 %513, %v317
        %v515 = vpop.permute.xlu0 %514
        %517 = vset.pattern.permute.xlu0 1
        %518 = vperm.xlu0 %517, %v318
        %v519 = vpop.permute.xlu0 %518
        %521 = vset.pattern.permute.xlu0 1
        %522 = vperm.xlu0 %521, %v319
        %v523 = vpop.permute.xlu0 %522
        %525 = vset.pattern.permute.xlu0 1
        %526 = vperm.xlu0 %525, %v320
        %v527 = vpop.permute.xlu0 %526
        %529 = vset.pattern.permute.xlu0 1
        %530 = vperm.xlu0 %529, %v321
        %v531 = vpop.permute.xlu0 %530
        %533 = vset.pattern.permute.xlu0 1
        %534 = vperm.xlu0 %533, %v322
        %v535 = vpop.permute.xlu0 %534
        %537 = vset.pattern.permute.xlu0 1
        %538 = vperm.xlu0 %537, %v323
        %v539 = vpop.permute.xlu0 %538
        %v541 = vlaneseq
        %v542 = vshrl.u32 %v541, 7
        %v543 = vsub.s32 1, %v542
        %v544 = vrot.slane %v324, %v543
        %v545 = vmax.f32 %v511, %v544
        %v546 = vmax.f32 %v515, %v544
        %v547 = vmax.f32 %v519, %v544
        %v548 = vmax.f32 %v523, %v544
        %v549 = vmax.f32 %v527, %v544
        %v550 = vmax.f32 %v531, %v544
        %v551 = vmax.f32 %v535, %v544
        %v552 = vmax.f32 %v539, %v544
        %v553 = vsub.f32 %v501, %v545
        %v554 = vsub.f32 %v502, %v546
        %v555 = vsub.f32 %v503, %v547
        %v556 = vsub.f32 %v504, %v548
        %v557 = vsub.f32 %v505, %v549
        %v558 = vsub.f32 %v506, %v550
        %v559 = vsub.f32 %v507, %v551
        %v560 = vsub.f32 %v508, %v552
        %v561 = vmax.f32 %v553, 0.0
        %v562 = vmax.f32 %v554, 0.0
        %v563 = vmax.f32 %v555, 0.0
        %v564 = vmax.f32 %v556, 0.0
        %v565 = vmax.f32 %v557, 0.0
        %v566 = vmax.f32 %v558, 0.0
        %v567 = vmax.f32 %v559, 0.0
        %v568 = vmax.f32 %v560, 0.0
        %v569 = vmul.f32 %v457, %v561
        %v570 = vmul.f32 %v458, %v562
        %v571 = vmul.f32 %v459, %v563
        %v572 = vmul.f32 %v460, %v564
        %v573 = vmul.f32 %v461, %v565
        %v574 = vmul.f32 %v462, %v566
        %v575 = vmul.f32 %v463, %v567
        %v576 = vmul.f32 %v464, %v568
        %v578 = vrot.slane %v324, 6
        %v580 = vsub.f32 %v324, %v578
        %v582 = vrot.slane %v580, 1
        %v584 = vmul.f32 %v580, %v582
        %585 = vset.pattern.permute.xlu0 4
        %586 = vperm.xlu0 %585, %v316
        %v587 = vpop.permute.xlu0 %586
        %589 = vset.pattern.permute.xlu0 4
        %590 = vperm.xlu0 %589, %v317
        %v591 = vpop.permute.xlu0 %590
        %593 = vset.pattern.permute.xlu0 4
        %594 = vperm.xlu0 %593, %v318
        %v595 = vpop.permute.xlu0 %594
        %597 = vset.pattern.permute.xlu0 4
        %598 = vperm.xlu0 %597, %v319
        %v599 = vpop.permute.xlu0 %598
        %601 = vset.pattern.permute.xlu0 4
        %602 = vperm.xlu0 %601, %v320
        %v603 = vpop.permute.xlu0 %602
        %605 = vset.pattern.permute.xlu0 4
        %606 = vperm.xlu0 %605, %v321
        %v607 = vpop.permute.xlu0 %606
        %609 = vset.pattern.permute.xlu0 4
        %610 = vperm.xlu0 %609, %v322
        %v611 = vpop.permute.xlu0 %610
        %613 = vset.pattern.permute.xlu0 4
        %614 = vperm.xlu0 %613, %v323
        %v615 = vpop.permute.xlu0 %614
        %v617 = vlaneseq
        %v618 = vshrl.u32 %v617, 7
        %v619 = vsub.s32 2, %v618
        %v620 = vrot.slane %v584, %v619
        %v621 = vadd.f32 %v587, %v620
        %v622 = vadd.f32 %v591, %v620
        %v623 = vadd.f32 %v595, %v620
        %v624 = vadd.f32 %v599, %v620
        %v625 = vadd.f32 %v603, %v620
        %v626 = vadd.f32 %v607, %v620
        %v627 = vadd.f32 %v611, %v620
        %v628 = vadd.f32 %v615, %v620
        %v629 = vsub.f32 %v621, %v569
        %v630 = vsub.f32 %v622, %v570
        %v631 = vsub.f32 %v623, %v571
        %v632 = vsub.f32 %v624, %v572
        %v633 = vsub.f32 %v625, %v573
        %v634 = vsub.f32 %v626, %v574
        %v635 = vsub.f32 %v627, %v575
        %v636 = vsub.f32 %v628, %v576
        %v637 = vmax.f32 %v629, 1e-08
        %v638 = vmax.f32 %v630, 1e-08
        %v639 = vmax.f32 %v631, 1e-08
        %v640 = vmax.f32 %v632, 1e-08
        %v641 = vmax.f32 %v633, 1e-08
        %v642 = vmax.f32 %v634, 1e-08
        %v643 = vmax.f32 %v635, 1e-08
        %v644 = vmax.f32 %v636, 1e-08
        %v645 = vrcp.pop %v637
        %v646 = vmul.f32 %v569, %v645
        %v647 = vrcp.pop %v638
        %v648 = vmul.f32 %v570, %v647
        %v649 = vrcp.pop %v639
        %v650 = vmul.f32 %v571, %v649
        %v651 = vrcp.pop %v640
        %v652 = vmul.f32 %v572, %v651
        %v653 = vrcp.pop %v641
        %v654 = vmul.f32 %v573, %v653
        %v655 = vrcp.pop %v642
        %v656 = vmul.f32 %v574, %v655
        %v657 = vrcp.pop %v643
        %v658 = vmul.f32 %v575, %v657
        %v659 = vrcp.pop %v644
        %v660 = vmul.f32 %v576, %v659
        %v661 = vsel %vm325, 1, 0
        %v662 = vlaneseq
        %v663 = vshrl.u32 %v662, 7
        %v664 = vsub.s32 4, %v663
        %v665 = vrot.slane %v661, %v664
        %vm666 = vcmp.eq.s32.totalorder %v665, 1
        %v667 = vsel %vm666, %v646, -1.0
        %v668 = vsel %vm666, %v648, -1.0
        %v669 = vsel %vm666, %v650, -1.0
        %v670 = vsel %vm666, %v652, -1.0
        %v671 = vsel %vm666, %v654, -1.0
        %v672 = vsel %vm666, %v656, -1.0
        %v673 = vsel %vm666, %v658, -1.0
        %v674 = vsel %vm666, %v660, -1.0
        %vm675 = vcmask 64512
        %v676 = vsel %vm675, %v667, -inf
        %677 = vmax.xlane.f32.xlu0 %v676
        %v678 = vpop.xlane.xlu0 %677
        %v679 = vsel %vm675, %v668, -inf
        %680 = vmax.xlane.f32.xlu0 %v679
        %v681 = vpop.xlane.xlu0 %680
        %v682 = vsel %vm675, %v669, -inf
        %683 = vmax.xlane.f32.xlu0 %v682
        %v684 = vpop.xlane.xlu0 %683
        %v685 = vsel %vm675, %v670, -inf
        %686 = vmax.xlane.f32.xlu0 %v685
        %v687 = vpop.xlane.xlu0 %686
        %v688 = vsel %vm675, %v671, -inf
        %689 = vmax.xlane.f32.xlu0 %v688
        %v690 = vpop.xlane.xlu0 %689
        %v691 = vsel %vm675, %v672, -inf
        %692 = vmax.xlane.f32.xlu0 %v691
        %v693 = vpop.xlane.xlu0 %692
        %v694 = vsel %vm675, %v673, -inf
        %695 = vmax.xlane.f32.xlu0 %v694
        %v696 = vpop.xlane.xlu0 %695
        %v697 = vsel %vm675, %v674, -inf
        %698 = vmax.xlane.f32.xlu0 %v697
        %v699 = vpop.xlane.xlu0 %698
        %v700 = vlaneseq
        %v701 = vand.u32 %v700, 127
        %vm702 = vcmp.ge.f32.partialorder %v667, %v678
        %vm703 = vcmp.ge.f32.partialorder %v668, %v681
        %vm704 = vcmp.ge.f32.partialorder %v669, %v684
        %vm705 = vcmp.ge.f32.partialorder %v670, %v687
        %vm706 = vcmp.ge.f32.partialorder %v671, %v690
        %vm707 = vcmp.ge.f32.partialorder %v672, %v693
        %vm708 = vcmp.ge.f32.partialorder %v673, %v696
        %vm709 = vcmp.ge.f32.partialorder %v674, %v699
        %v710 = vsel %vm702, %v701, 8
        %v711 = vsel %vm703, %v701, 8
        %v712 = vsel %vm704, %v701, 8
        %v713 = vsel %vm705, %v701, 8
        %v714 = vsel %vm706, %v701, 8
        %v715 = vsel %vm707, %v701, 8
        %v716 = vsel %vm708, %v701, 8
        %v717 = vsel %vm709, %v701, 8
        %v718 = vsel %vm675, %v710, 2147483647
        %v719 = vand.u32 %v718, 65535
        %v720 = vshra.s32 %v718, 16
        %v721 = vcvt.s32.f32 %v719
        %v722 = vcvt.s32.f32 %v720
        %723 = vmin.xlane.f32.xlu0 %v722
        %v724 = vpop.xlane.xlu0 %723
        %vm725 = vcmp.eq.f32.partialorder %v722, %v724
        %v726 = vsel %vm725, %v721, inf
        %727 = vmin.xlane.f32.xlu0 %v726
        %v728 = vpop.xlane.xlu0 %727
        %v729 = vcvt.f32.s32 %v728
        %v730 = vcvt.f32.s32 %v724
        %v731 = vshll.u32 %v730, 16
        %v732 = vadd.s32 %v731, %v729
        %v733 = vsel %vm675, %v711, 2147483647
        %v734 = vand.u32 %v733, 65535
        %v735 = vshra.s32 %v733, 16
        %v736 = vcvt.s32.f32 %v734
        %v737 = vcvt.s32.f32 %v735
        %738 = vmin.xlane.f32.xlu0 %v737
        %v739 = vpop.xlane.xlu0 %738
        %vm740 = vcmp.eq.f32.partialorder %v737, %v739
        %v741 = vsel %vm740, %v736, inf
        %742 = vmin.xlane.f32.xlu0 %v741
        %v743 = vpop.xlane.xlu0 %742
        %v744 = vcvt.f32.s32 %v743
        %v745 = vcvt.f32.s32 %v739
        %v746 = vshll.u32 %v745, 16
        %v747 = vadd.s32 %v746, %v744
        %v748 = vsel %vm675, %v712, 2147483647
        %v749 = vand.u32 %v748, 65535
        %v750 = vshra.s32 %v748, 16
        %v751 = vcvt.s32.f32 %v749
        %v752 = vcvt.s32.f32 %v750
        %753 = vmin.xlane.f32.xlu0 %v752
        %v754 = vpop.xlane.xlu0 %753
        %vm755 = vcmp.eq.f32.partialorder %v752, %v754
        %v756 = vsel %vm755, %v751, inf
        %757 = vmin.xlane.f32.xlu0 %v756
        %v758 = vpop.xlane.xlu0 %757
        %v759 = vcvt.f32.s32 %v758
        %v760 = vcvt.f32.s32 %v754
        %v761 = vshll.u32 %v760, 16
        %v762 = vadd.s32 %v761, %v759
        %v763 = vsel %vm675, %v713, 2147483647
        %v764 = vand.u32 %v763, 65535
        %v765 = vshra.s32 %v763, 16
        %v766 = vcvt.s32.f32 %v764
        %v767 = vcvt.s32.f32 %v765
        %768 = vmin.xlane.f32.xlu0 %v767
        %v769 = vpop.xlane.xlu0 %768
        %vm770 = vcmp.eq.f32.partialorder %v767, %v769
        %v771 = vsel %vm770, %v766, inf
        %772 = vmin.xlane.f32.xlu0 %v771
        %v773 = vpop.xlane.xlu0 %772
        %v774 = vcvt.f32.s32 %v773
        %v775 = vcvt.f32.s32 %v769
        %v776 = vshll.u32 %v775, 16
        %v777 = vadd.s32 %v776, %v774
        %v778 = vsel %vm675, %v714, 2147483647
        %v779 = vand.u32 %v778, 65535
        %v780 = vshra.s32 %v778, 16
        %v781 = vcvt.s32.f32 %v779
        %v782 = vcvt.s32.f32 %v780
        %783 = vmin.xlane.f32.xlu0 %v782
        %v784 = vpop.xlane.xlu0 %783
        %vm785 = vcmp.eq.f32.partialorder %v782, %v784
        %v786 = vsel %vm785, %v781, inf
        %787 = vmin.xlane.f32.xlu0 %v786
        %v788 = vpop.xlane.xlu0 %787
        %v789 = vcvt.f32.s32 %v788
        %v790 = vcvt.f32.s32 %v784
        %v791 = vshll.u32 %v790, 16
        %v792 = vadd.s32 %v791, %v789
        %v793 = vsel %vm675, %v715, 2147483647
        %v794 = vand.u32 %v793, 65535
        %v795 = vshra.s32 %v793, 16
        %v796 = vcvt.s32.f32 %v794
        %v797 = vcvt.s32.f32 %v795
        %798 = vmin.xlane.f32.xlu0 %v797
        %v799 = vpop.xlane.xlu0 %798
        %vm800 = vcmp.eq.f32.partialorder %v797, %v799
        %v801 = vsel %vm800, %v796, inf
        %802 = vmin.xlane.f32.xlu0 %v801
        %v803 = vpop.xlane.xlu0 %802
        %v804 = vcvt.f32.s32 %v803
        %v805 = vcvt.f32.s32 %v799
        %v806 = vshll.u32 %v805, 16
        %v807 = vadd.s32 %v806, %v804
        %v808 = vsel %vm675, %v716, 2147483647
        %v809 = vand.u32 %v808, 65535
        %v810 = vshra.s32 %v808, 16
        %v811 = vcvt.s32.f32 %v809
        %v812 = vcvt.s32.f32 %v810
        %813 = vmin.xlane.f32.xlu0 %v812
        %v814 = vpop.xlane.xlu0 %813
        %vm815 = vcmp.eq.f32.partialorder %v812, %v814
        %v816 = vsel %vm815, %v811, inf
        %817 = vmin.xlane.f32.xlu0 %v816
        %v818 = vpop.xlane.xlu0 %817
        %v819 = vcvt.f32.s32 %v818
        %v820 = vcvt.f32.s32 %v814
        %v821 = vshll.u32 %v820, 16
        %v822 = vadd.s32 %v821, %v819
        %v823 = vsel %vm675, %v717, 2147483647
        %v824 = vand.u32 %v823, 65535
        %v825 = vshra.s32 %v823, 16
        %v826 = vcvt.s32.f32 %v824
        %v827 = vcvt.s32.f32 %v825
        %828 = vmin.xlane.f32.xlu0 %v827
        %v829 = vpop.xlane.xlu0 %828
        %vm830 = vcmp.eq.f32.partialorder %v827, %v829
        %v831 = vsel %vm830, %v826, inf
        %832 = vmin.xlane.f32.xlu0 %v831
        %v833 = vpop.xlane.xlu0 %832
        %v834 = vcvt.f32.s32 %v833
        %v835 = vcvt.f32.s32 %v829
        %v836 = vshll.u32 %v835, 16
        %v837 = vadd.s32 %v836, %v834
        %vm838 = vcmp.eq.s32.totalorder %v701, %v732
        %vm839 = vcmp.eq.s32.totalorder %v701, %v747
        %vm840 = vcmp.eq.s32.totalorder %v701, %v762
        %vm841 = vcmp.eq.s32.totalorder %v701, %v777
        %vm842 = vcmp.eq.s32.totalorder %v701, %v792
        %vm843 = vcmp.eq.s32.totalorder %v701, %v807
        %vm844 = vcmp.eq.s32.totalorder %v701, %v822
        %vm845 = vcmp.eq.s32.totalorder %v701, %v837
        %v846 = vsel %vm838, 1, 0
        %v847 = vsel %vm839, 1, 0
        %v848 = vsel %vm840, 1, 0
        %v849 = vsel %vm841, 1, 0
        %v850 = vsel %vm842, 1, 0
        %v851 = vsel %vm843, 1, 0
        %v852 = vsel %vm844, 1, 0
        %v853 = vsel %vm845, 1, 0
        %v854 = vcvt.s32.f32 %v846
        %v855 = vcvt.s32.f32 %v847
        %v856 = vcvt.s32.f32 %v848
        %v857 = vcvt.s32.f32 %v849
        %v858 = vcvt.s32.f32 %v850
        %v859 = vcvt.s32.f32 %v851
        %v860 = vcvt.s32.f32 %v852
        %v861 = vcvt.s32.f32 %v853
        %v862 = vmul.f32 %v854, %v440
        %v863 = vmul.f32 %v855, %v440
        %v864 = vmul.f32 %v856, %v440
        %v865 = vmul.f32 %v857, %v440
        %v866 = vmul.f32 %v858, %v440
        %v867 = vmul.f32 %v859, %v440
        %v868 = vmul.f32 %v860, %v440
        %v869 = vmul.f32 %v861, %v440
        %v870 = vsel %vm675, %v862, 0.0
        %871 = vadd.xlane.f32.xlu0 %v870
        %v872 = vpop.xlane.xlu0 %871
        %v873 = vsel %vm675, %v863, 0.0
        %874 = vadd.xlane.f32.xlu0 %v873
        %v875 = vpop.xlane.xlu0 %874
        %v876 = vsel %vm675, %v864, 0.0
        %877 = vadd.xlane.f32.xlu0 %v876
        %v878 = vpop.xlane.xlu0 %877
        %v879 = vsel %vm675, %v865, 0.0
        %880 = vadd.xlane.f32.xlu0 %v879
        %v881 = vpop.xlane.xlu0 %880
        %v882 = vsel %vm675, %v866, 0.0
        %883 = vadd.xlane.f32.xlu0 %v882
        %v884 = vpop.xlane.xlu0 %883
        %v885 = vsel %vm675, %v867, 0.0
        %886 = vadd.xlane.f32.xlu0 %v885
        %v887 = vpop.xlane.xlu0 %886
        %v888 = vsel %vm675, %v868, 0.0
        %889 = vadd.xlane.f32.xlu0 %v888
        %v890 = vpop.xlane.xlu0 %889
        %v891 = vsel %vm675, %v869, 0.0
        %892 = vadd.xlane.f32.xlu0 %v891
        %v893 = vpop.xlane.xlu0 %892
        %v894 = vmul.f32 %v854, %v544
        %v895 = vmul.f32 %v855, %v544
        %v896 = vmul.f32 %v856, %v544
        %v897 = vmul.f32 %v857, %v544
        %v898 = vmul.f32 %v858, %v544
        %v899 = vmul.f32 %v859, %v544
        %v900 = vmul.f32 %v860, %v544
        %v901 = vmul.f32 %v861, %v544
        %v902 = vsel %vm675, %v894, 0.0
        %903 = vadd.xlane.f32.xlu0 %v902
        %v904 = vpop.xlane.xlu0 %903
        %v905 = vsel %vm675, %v895, 0.0
        %906 = vadd.xlane.f32.xlu0 %v905
        %v907 = vpop.xlane.xlu0 %906
        %v908 = vsel %vm675, %v896, 0.0
        %909 = vadd.xlane.f32.xlu0 %v908
        %v910 = vpop.xlane.xlu0 %909
        %v911 = vsel %vm675, %v897, 0.0
        %912 = vadd.xlane.f32.xlu0 %v911
        %v913 = vpop.xlane.xlu0 %912
        %v914 = vsel %vm675, %v898, 0.0
        %915 = vadd.xlane.f32.xlu0 %v914
        %v916 = vpop.xlane.xlu0 %915
        %v917 = vsel %vm675, %v899, 0.0
        %918 = vadd.xlane.f32.xlu0 %v917
        %v919 = vpop.xlane.xlu0 %918
        %v920 = vsel %vm675, %v900, 0.0
        %921 = vadd.xlane.f32.xlu0 %v920
        %v922 = vpop.xlane.xlu0 %921
        %v923 = vsel %vm675, %v901, 0.0
        %924 = vadd.xlane.f32.xlu0 %v923
        %v925 = vpop.xlane.xlu0 %924
        %v926 = vmul.f32 %v854, %v396
        %v927 = vmul.f32 %v855, %v396
        %v928 = vmul.f32 %v856, %v396
        %v929 = vmul.f32 %v857, %v396
        %v930 = vmul.f32 %v858, %v396
        %v931 = vmul.f32 %v859, %v396
        %v932 = vmul.f32 %v860, %v396
        %v933 = vmul.f32 %v861, %v396
        %v934 = vsel %vm675, %v926, 0.0
        %935 = vadd.xlane.f32.xlu0 %v934
        %v936 = vpop.xlane.xlu0 %935
        %v937 = vsel %vm675, %v927, 0.0
        %938 = vadd.xlane.f32.xlu0 %v937
        %v939 = vpop.xlane.xlu0 %938
        %v940 = vsel %vm675, %v928, 0.0
        %941 = vadd.xlane.f32.xlu0 %v940
        %v942 = vpop.xlane.xlu0 %941
        %v943 = vsel %vm675, %v929, 0.0
        %944 = vadd.xlane.f32.xlu0 %v943
        %v945 = vpop.xlane.xlu0 %944
        %v946 = vsel %vm675, %v930, 0.0
        %947 = vadd.xlane.f32.xlu0 %v946
        %v948 = vpop.xlane.xlu0 %947
        %v949 = vsel %vm675, %v931, 0.0
        %950 = vadd.xlane.f32.xlu0 %v949
        %v951 = vpop.xlane.xlu0 %950
        %v952 = vsel %vm675, %v932, 0.0
        %953 = vadd.xlane.f32.xlu0 %v952
        %v954 = vpop.xlane.xlu0 %953
        %v955 = vsel %vm675, %v933, 0.0
        %956 = vadd.xlane.f32.xlu0 %v955
        %v957 = vpop.xlane.xlu0 %956
        %v958 = vmul.f32 %v854, %v500
        %v959 = vmul.f32 %v855, %v500
        %v960 = vmul.f32 %v856, %v500
        %v961 = vmul.f32 %v857, %v500
        %v962 = vmul.f32 %v858, %v500
        %v963 = vmul.f32 %v859, %v500
        %v964 = vmul.f32 %v860, %v500
        %v965 = vmul.f32 %v861, %v500
        %v966 = vsel %vm675, %v958, 0.0
        %967 = vadd.xlane.f32.xlu0 %v966
        %v968 = vpop.xlane.xlu0 %967
        %v969 = vsel %vm675, %v959, 0.0
        %970 = vadd.xlane.f32.xlu0 %v969
        %v971 = vpop.xlane.xlu0 %970
        %v972 = vsel %vm675, %v960, 0.0
        %973 = vadd.xlane.f32.xlu0 %v972
        %v974 = vpop.xlane.xlu0 %973
        %v975 = vsel %vm675, %v961, 0.0
        %976 = vadd.xlane.f32.xlu0 %v975
        %v977 = vpop.xlane.xlu0 %976
        %v978 = vsel %vm675, %v962, 0.0
        %979 = vadd.xlane.f32.xlu0 %v978
        %v980 = vpop.xlane.xlu0 %979
        %v981 = vsel %vm675, %v963, 0.0
        %982 = vadd.xlane.f32.xlu0 %v981
        %v983 = vpop.xlane.xlu0 %982
        %v984 = vsel %vm675, %v964, 0.0
        %985 = vadd.xlane.f32.xlu0 %v984
        %v986 = vpop.xlane.xlu0 %985
        %v987 = vsel %vm675, %v965, 0.0
        %988 = vadd.xlane.f32.xlu0 %v987
        %v989 = vpop.xlane.xlu0 %988
        %v990 = vlaneseq
        %v991 = vshrl.u32 %v990, 7
        %v992 = vsub.s32 4, %v991
        %v993 = vrot.slane %v324, %v992
        %v994 = vmul.f32 %v854, %v993
        %v995 = vmul.f32 %v855, %v993
        %v996 = vmul.f32 %v856, %v993
        %v997 = vmul.f32 %v857, %v993
        %v998 = vmul.f32 %v858, %v993
        %v999 = vmul.f32 %v859, %v993
        %v1000 = vmul.f32 %v860, %v993
        %v1001 = vmul.f32 %v861, %v993
        %v1002 = vsel %vm675, %v994, 0.0
        %1003 = vadd.xlane.f32.xlu0 %v1002
        %v1004 = vpop.xlane.xlu0 %1003
        %v1005 = vsel %vm675, %v995, 0.0
        %1006 = vadd.xlane.f32.xlu0 %v1005
        %v1007 = vpop.xlane.xlu0 %1006
        %v1008 = vsel %vm675, %v996, 0.0
        %1009 = vadd.xlane.f32.xlu0 %v1008
        %v1010 = vpop.xlane.xlu0 %1009
        %v1011 = vsel %vm675, %v997, 0.0
        %1012 = vadd.xlane.f32.xlu0 %v1011
        %v1013 = vpop.xlane.xlu0 %1012
        %v1014 = vsel %vm675, %v998, 0.0
        %1015 = vadd.xlane.f32.xlu0 %v1014
        %v1016 = vpop.xlane.xlu0 %1015
        %v1017 = vsel %vm675, %v999, 0.0
        %1018 = vadd.xlane.f32.xlu0 %v1017
        %v1019 = vpop.xlane.xlu0 %1018
        %v1020 = vsel %vm675, %v1000, 0.0
        %1021 = vadd.xlane.f32.xlu0 %v1020
        %v1022 = vpop.xlane.xlu0 %1021
        %v1023 = vsel %vm675, %v1001, 0.0
        %1024 = vadd.xlane.f32.xlu0 %v1023
        %v1025 = vpop.xlane.xlu0 %1024
        %vm1026 = vcmp.ge.f32.partialorder %v678, 0.5
        %vm1027 = vcmp.ge.f32.partialorder %v681, 0.5
        %vm1028 = vcmp.ge.f32.partialorder %v684, 0.5
        %vm1029 = vcmp.ge.f32.partialorder %v687, 0.5
        %vm1030 = vcmp.ge.f32.partialorder %v690, 0.5
        %vm1031 = vcmp.ge.f32.partialorder %v693, 0.5
        %vm1032 = vcmp.ge.f32.partialorder %v696, 0.5
        %vm1033 = vcmp.ge.f32.partialorder %v699, 0.5
        %vm1034 = vmand %vm1026, %vm345
        %vm1035 = vmand %vm1027, %vm346
        %vm1036 = vmand %vm1028, %vm347
        %vm1037 = vmand %vm1029, %vm348
        %vm1038 = vmand %vm1030, %vm349
        %vm1039 = vmand %vm1031, %vm350
        %vm1040 = vmand %vm1032, %vm351
        %vm1041 = vmand %vm1033, %vm352
        %vm1042 = vcmp.lt.f32.partialorder %v678, 0.4
        %vm1043 = vcmp.lt.f32.partialorder %v681, 0.4
        %vm1044 = vcmp.lt.f32.partialorder %v684, 0.4
        %vm1045 = vcmp.lt.f32.partialorder %v687, 0.4
        %vm1046 = vcmp.lt.f32.partialorder %v690, 0.4
        %vm1047 = vcmp.lt.f32.partialorder %v693, 0.4
        %vm1048 = vcmp.lt.f32.partialorder %v696, 0.4
        %vm1049 = vcmp.lt.f32.partialorder %v699, 0.4
        %v1050 = vsel %vm1034, 1, 0
        %v1051 = vsel %vm1035, 1, 0
        %v1052 = vsel %vm1036, 1, 0
        %v1053 = vsel %vm1037, 1, 0
        %v1054 = vsel %vm1038, 1, 0
        %v1055 = vsel %vm1039, 1, 0
        %v1056 = vsel %vm1040, 1, 0
        %v1057 = vsel %vm1041, 1, 0
        %v1058 = vcvt.s32.f32 %v1050
        %v1059 = vcvt.s32.f32 %v1051
        %v1060 = vcvt.s32.f32 %v1052
        %v1061 = vcvt.s32.f32 %v1053
        %v1062 = vcvt.s32.f32 %v1054
        %v1063 = vcvt.s32.f32 %v1055
        %v1064 = vcvt.s32.f32 %v1056
        %v1065 = vcvt.s32.f32 %v1057
        %vm1066 = vcmask 7168
        %v1067 = vsel %vm1066, %v1058, 0.0
        %v1068 = vsel %vm1066, %v1059, 0.0
        %v1069 = vadd.f32 %v1067, %v1068
        %v1070 = vsel %vm1066, %v1060, 0.0
        %v1071 = vadd.f32 %v1069, %v1070
        %v1072 = vsel %vm1066, %v1061, 0.0
        %v1073 = vadd.f32 %v1071, %v1072
        %v1074 = vsel %vm1066, %v1062, 0.0
        %v1075 = vadd.f32 %v1073, %v1074
        %v1076 = vsel %vm1066, %v1063, 0.0
        %v1077 = vadd.f32 %v1075, %v1076
        %v1078 = vsel %vm1066, %v1064, 0.0
        %v1079 = vadd.f32 %v1077, %v1078
        %v1080 = vsel %vm1066, %v1065, 0.0
        %v1081 = vadd.f32 %v1079, %v1080
        %1082 = vadd.xlane.f32.xlu0 %v1081
        %v1083 = vpop.xlane.xlu0 %1082
        %v1084 = vrot.slane %v1083, 4
        %v1085 = vadd.f32 %v1083, %v1084
        %v1086 = vrot.slane %v1085, 2
        %v1087 = vadd.f32 %v1085, %v1086
        %v1088 = vrot.slane %v1087, 1
        %v1089 = vadd.f32 %v1087, %v1088
        %s1090 = vtos %v1089
        %v1091 = vld [vmem:[%s286] sm:$0xff]
        %v1092 = vld [vmem:[%s286 + $0x8] sm:$0xff]
        %v1093 = vld [vmem:[%s286 + $0x10] sm:$0xff]
        %v1094 = vld [vmem:[%s286 + $0x18] sm:$0xff]
        %v1095 = vld [vmem:[%s286 + $0x20] sm:$0xff]
        %v1096 = vld [vmem:[%s286 + $0x28] sm:$0xff]
        %v1097 = vld [vmem:[%s286 + $0x30] sm:$0xff]
        %v1098 = vld [vmem:[%s286 + $0x38] sm:$0xff]
        %v1099 = vmax.f32 %v1091, 0.0001
        %v1100 = vmax.f32 %v1092, 0.0001
        %v1101 = vmax.f32 %v1093, 0.0001
        %v1102 = vmax.f32 %v1094, 0.0001
        %v1103 = vmax.f32 %v1095, 0.0001
        %v1104 = vmax.f32 %v1096, 0.0001
        %v1105 = vmax.f32 %v1097, 0.0001
        %v1106 = vmax.f32 %v1098, 0.0001
        %v1107 = vmin.f32 %v1099, 0.9999
        %v1108 = vmin.f32 %v1100, 0.9999
        %v1109 = vmin.f32 %v1101, 0.9999
        %v1110 = vmin.f32 %v1102, 0.9999
        %v1111 = vmin.f32 %v1103, 0.9999
        %v1112 = vmin.f32 %v1104, 0.9999
        %v1113 = vmin.f32 %v1105, 0.9999
        %v1114 = vmin.f32 %v1106, 0.9999
        %v1115 = vcvt.s32.f32 %v701
        %vm1116 = vcmp.eq.f32.partialorder %v1115, %v1004
        %vm1117 = vcmp.eq.f32.partialorder %v1115, %v1007
        %vm1118 = vcmp.eq.f32.partialorder %v1115, %v1010
        %vm1119 = vcmp.eq.f32.partialorder %v1115, %v1013
        %vm1120 = vcmp.eq.f32.partialorder %v1115, %v1016
        %vm1121 = vcmp.eq.f32.partialorder %v1115, %v1019
        %vm1122 = vcmp.eq.f32.partialorder %v1115, %v1022
        %vm1123 = vcmp.eq.f32.partialorder %v1115, %v1025
        %v1124 = vsel %vm1116, 1, 0
        %v1125 = vsel %vm1117, 1, 0
        %v1126 = vsel %vm1118, 1, 0
        %v1127 = vsel %vm1119, 1, 0
        %v1128 = vsel %vm1120, 1, 0
        %v1129 = vsel %vm1121, 1, 0
        %v1130 = vsel %vm1122, 1, 0
        %v1131 = vsel %vm1123, 1, 0
        %v1132 = vcvt.s32.f32 %v1124
        %v1133 = vcvt.s32.f32 %v1125
        %v1134 = vcvt.s32.f32 %v1126
        %v1135 = vcvt.s32.f32 %v1127
        %v1136 = vcvt.s32.f32 %v1128
        %v1137 = vcvt.s32.f32 %v1129
        %v1138 = vcvt.s32.f32 %v1130
        %v1139 = vcvt.s32.f32 %v1131
        %v1140 = vsel %vm1042, 0.0, -1.0
        %v1141 = vsel %vm1043, 0.0, -1.0
        %v1142 = vsel %vm1044, 0.0, -1.0
        %v1143 = vsel %vm1045, 0.0, -1.0
        %v1144 = vsel %vm1046, 0.0, -1.0
        %v1145 = vsel %vm1047, 0.0, -1.0
        %v1146 = vsel %vm1048, 0.0, -1.0
        %v1147 = vsel %vm1049, 0.0, -1.0
        %vm1148 = vcmp.eq.s32.totalorder %v1050, 1
        %vm1149 = vcmp.eq.s32.totalorder %v1051, 1
        %vm1150 = vcmp.eq.s32.totalorder %v1052, 1
        %vm1151 = vcmp.eq.s32.totalorder %v1053, 1
        %vm1152 = vcmp.eq.s32.totalorder %v1054, 1
        %vm1153 = vcmp.eq.s32.totalorder %v1055, 1
        %vm1154 = vcmp.eq.s32.totalorder %v1056, 1
        %vm1155 = vcmp.eq.s32.totalorder %v1057, 1
        %v1156 = vsel %vm1148, %v1132, %v1140
        %v1157 = vsel %vm1149, %v1133, %v1141
        %v1158 = vsel %vm1150, %v1134, %v1142
        %v1159 = vsel %vm1151, %v1135, %v1143
        %v1160 = vsel %vm1152, %v1136, %v1144
        %v1161 = vsel %vm1153, %v1137, %v1145
        %v1162 = vsel %vm1154, %v1138, %v1146
        %v1163 = vsel %vm1155, %v1139, %v1147
        %vm1164 = vcmp.eq.f32.partialorder %v1156, 1.0
        %vm1165 = vcmp.eq.f32.partialorder %v1157, 1.0
        %vm1166 = vcmp.eq.f32.partialorder %v1158, 1.0
        %vm1167 = vcmp.eq.f32.partialorder %v1159, 1.0
        %vm1168 = vcmp.eq.f32.partialorder %v1160, 1.0
        %vm1169 = vcmp.eq.f32.partialorder %v1161, 1.0
        %vm1170 = vcmp.eq.f32.partialorder %v1162, 1.0
        %vm1171 = vcmp.eq.f32.partialorder %v1163, 1.0
        %v1172 = vsub.f32 1.0, %v1107
        %v1173 = vsub.f32 1.0, %v1108
        %v1174 = vsub.f32 1.0, %v1109
        %v1175 = vsub.f32 1.0, %v1110
        %v1176 = vsub.f32 1.0, %v1111
        %v1177 = vsub.f32 1.0, %v1112
        %v1178 = vsub.f32 1.0, %v1113
        %v1179 = vsub.f32 1.0, %v1114
        %v1180 = vsel %vm1164, %v1107, %v1172
        %v1181 = vsel %vm1165, %v1108, %v1173
        %v1182 = vsel %vm1166, %v1109, %v1174
        %v1183 = vsel %vm1167, %v1110, %v1175
        %v1184 = vsel %vm1168, %v1111, %v1176
        %v1185 = vsel %vm1169, %v1112, %v1177
        %v1186 = vsel %vm1170, %v1113, %v1178
        %v1187 = vsel %vm1171, %v1114, %v1179
        %v1188 = vsel %vm1164, %v1172, %v1107
        %v1189 = vsel %vm1165, %v1173, %v1108
        %v1190 = vsel %vm1166, %v1174, %v1109
        %v1191 = vsel %vm1167, %v1175, %v1110
        %v1192 = vsel %vm1168, %v1176, %v1111
        %v1193 = vsel %vm1169, %v1177, %v1112
        %v1194 = vsel %vm1170, %v1178, %v1113
        %v1195 = vsel %vm1171, %v1179, %v1114
        %v1196 = vsel %vm1164, 0.25, 0.75
        %v1197 = vsel %vm1165, 0.25, 0.75
        %v1198 = vsel %vm1166, 0.25, 0.75
        %v1199 = vsel %vm1167, 0.25, 0.75
        %v1200 = vsel %vm1168, 0.25, 0.75
        %v1201 = vsel %vm1169, 0.25, 0.75
        %v1202 = vsel %vm1170, 0.25, 0.75
        %v1203 = vsel %vm1171, 0.25, 0.75
        %vm1204 = vcmp.ne.f32.partialorder %v1156, -1.0
        %vm1205 = vcmp.ne.f32.partialorder %v1157, -1.0
        %vm1206 = vcmp.ne.f32.partialorder %v1158, -1.0
        %vm1207 = vcmp.ne.f32.partialorder %v1159, -1.0
        %vm1208 = vcmp.ne.f32.partialorder %v1160, -1.0
        %vm1209 = vcmp.ne.f32.partialorder %v1161, -1.0
        %vm1210 = vcmp.ne.f32.partialorder %v1162, -1.0
        %vm1211 = vcmp.ne.f32.partialorder %v1163, -1.0
        %v1212 = vsel %vm345, 1, 0
        %v1213 = vsel %vm346, 1, 0
        %v1214 = vsel %vm347, 1, 0
        %v1215 = vsel %vm348, 1, 0
        %v1216 = vsel %vm349, 1, 0
        %v1217 = vsel %vm350, 1, 0
        %v1218 = vsel %vm351, 1, 0
        %v1219 = vsel %vm352, 1, 0
        %vm1220 = vcmp.eq.s32.totalorder %v1212, 1
        %vm1221 = vcmp.eq.s32.totalorder %v1213, 1
        %vm1222 = vcmp.eq.s32.totalorder %v1214, 1
        %vm1223 = vcmp.eq.s32.totalorder %v1215, 1
        %vm1224 = vcmp.eq.s32.totalorder %v1216, 1
        %vm1225 = vcmp.eq.s32.totalorder %v1217, 1
        %vm1226 = vcmp.eq.s32.totalorder %v1218, 1
        %vm1227 = vcmp.eq.s32.totalorder %v1219, 1
        %vm1228 = vmand %vm1204, %vm1220
        %vm1229 = vmand %vm1205, %vm1221
        %vm1230 = vmand %vm1206, %vm1222
        %vm1231 = vmand %vm1207, %vm1223
        %vm1232 = vmand %vm1208, %vm1224
        %vm1233 = vmand %vm1209, %vm1225
        %vm1234 = vmand %vm1210, %vm1226
        %vm1235 = vmand %vm1211, %vm1227
        %v1236 = vmul.f32 %v1196, %v1188
        %v1237 = vmul.f32 %v1197, %v1189
        %v1238 = vmul.f32 %v1198, %v1190
        %v1239 = vmul.f32 %v1199, %v1191
        %v1240 = vmul.f32 %v1200, %v1192
        %v1241 = vmul.f32 %v1201, %v1193
        %v1242 = vmul.f32 %v1202, %v1194
        %v1243 = vmul.f32 %v1203, %v1195
        %v1244 = vmul.f32 %v1236, %v1188
        %v1245 = vmul.f32 %v1237, %v1189
        %v1246 = vmul.f32 %v1238, %v1190
        %v1247 = vmul.f32 %v1239, %v1191
        %v1248 = vmul.f32 %v1240, %v1192
        %v1249 = vmul.f32 %v1241, %v1193
        %v1250 = vmul.f32 %v1242, %v1194
        %v1251 = vmul.f32 %v1243, %v1195
        %v1252 = vlog2.pop %v1180
        %v1253 = vmul.f32 %v1252, 0.6931472
        %v1254 = vlog2.pop %v1181
        %v1255 = vmul.f32 %v1254, 0.6931472
        %v1256 = vlog2.pop %v1182
        %v1257 = vmul.f32 %v1256, 0.6931472
        %v1258 = vlog2.pop %v1183
        %v1259 = vmul.f32 %v1258, 0.6931472
        %v1260 = vlog2.pop %v1184
        %v1261 = vmul.f32 %v1260, 0.6931472
        %v1262 = vlog2.pop %v1185
        %v1263 = vmul.f32 %v1262, 0.6931472
        %v1264 = vlog2.pop %v1186
        %v1265 = vmul.f32 %v1264, 0.6931472
        %v1266 = vlog2.pop %v1187
        %v1267 = vmul.f32 %v1266, 0.6931472
        %v1268 = vsub.f32 0.0, %v1253
        %v1269 = vsub.f32 0.0, %v1255
        %v1270 = vsub.f32 0.0, %v1257
        %v1271 = vsub.f32 0.0, %v1259
        %v1272 = vsub.f32 0.0, %v1261
        %v1273 = vsub.f32 0.0, %v1263
        %v1274 = vsub.f32 0.0, %v1265
        %v1275 = vsub.f32 0.0, %v1267
        %v1276 = vmul.f32 %v1244, %v1268
        %v1277 = vmul.f32 %v1245, %v1269
        %v1278 = vmul.f32 %v1246, %v1270
        %v1279 = vmul.f32 %v1247, %v1271
        %v1280 = vmul.f32 %v1248, %v1272
        %v1281 = vmul.f32 %v1249, %v1273
        %v1282 = vmul.f32 %v1250, %v1274
        %v1283 = vmul.f32 %v1251, %v1275
        %v1284 = vsel %vm1228, %v1276, 0.0
        %v1285 = vsel %vm1229, %v1277, 0.0
        %v1286 = vsel %vm1230, %v1278, 0.0
        %v1287 = vsel %vm1231, %v1279, 0.0
        %v1288 = vsel %vm1232, %v1280, 0.0
        %v1289 = vsel %vm1233, %v1281, 0.0
        %v1290 = vsel %vm1234, %v1282, 0.0
        %v1291 = vsel %vm1235, %v1283, 0.0
        %v1292 = vsel %vm675, %v1284, 0.0
        %v1293 = vsel %vm675, %v1285, 0.0
        %v1294 = vadd.f32 %v1292, %v1293
        %v1295 = vsel %vm675, %v1286, 0.0
        %v1296 = vadd.f32 %v1294, %v1295
        %v1297 = vsel %vm675, %v1287, 0.0
        %v1298 = vadd.f32 %v1296, %v1297
        %v1299 = vsel %vm675, %v1288, 0.0
        %v1300 = vadd.f32 %v1298, %v1299
        %v1301 = vsel %vm675, %v1289, 0.0
        %v1302 = vadd.f32 %v1300, %v1301
        %v1303 = vsel %vm675, %v1290, 0.0
        %v1304 = vadd.f32 %v1302, %v1303
        %v1305 = vsel %vm675, %v1291, 0.0
        %v1306 = vadd.f32 %v1304, %v1305
        %1307 = vadd.xlane.f32.xlu0 %v1306
        %v1308 = vpop.xlane.xlu0 %1307
        %v1309 = vrot.slane %v1308, 4
        %v1310 = vadd.f32 %v1308, %v1309
        %v1311 = vrot.slane %v1310, 2
        %v1312 = vadd.f32 %v1310, %v1311
        %v1313 = vrot.slane %v1312, 1
        %v1314 = vadd.f32 %v1312, %v1313
        %s1315 = vtos %v1314
        %v1316 = vsub.f32 %v936, %v872
        %v1317 = vsub.f32 %v939, %v875
        %v1318 = vsub.f32 %v942, %v878
        %v1319 = vsub.f32 %v945, %v881
        %v1320 = vsub.f32 %v948, %v884
        %v1321 = vsub.f32 %v951, %v887
        %v1322 = vsub.f32 %v954, %v890
        %v1323 = vsub.f32 %v957, %v893
        %v1324 = vsub.f32 %v968, %v904
        %v1325 = vsub.f32 %v971, %v907
        %v1326 = vsub.f32 %v974, %v910
        %v1327 = vsub.f32 %v977, %v913
        %v1328 = vsub.f32 %v980, %v916
        %v1329 = vsub.f32 %v983, %v919
        %v1330 = vsub.f32 %v986, %v922
        %v1331 = vsub.f32 %v989, %v925
        %v1332 = vmul.f32 %v1316, 0.5
        %v1333 = vmul.f32 %v1317, 0.5
        %v1334 = vmul.f32 %v1318, 0.5
        %v1335 = vmul.f32 %v1319, 0.5
        %v1336 = vmul.f32 %v1320, 0.5
        %v1337 = vmul.f32 %v1321, 0.5
        %v1338 = vmul.f32 %v1322, 0.5
        %v1339 = vmul.f32 %v1323, 0.5
        %v1340 = vadd.f32 %v872, %v1332
        %v1341 = vadd.f32 %v875, %v1333
        %v1342 = vadd.f32 %v878, %v1334
        %v1343 = vadd.f32 %v881, %v1335
        %v1344 = vadd.f32 %v884, %v1336
        %v1345 = vadd.f32 %v887, %v1337
        %v1346 = vadd.f32 %v890, %v1338
        %v1347 = vadd.f32 %v893, %v1339
        %v1348 = vmul.f32 %v1324, 0.5
        %v1349 = vmul.f32 %v1325, 0.5
        %v1350 = vmul.f32 %v1326, 0.5
        %v1351 = vmul.f32 %v1327, 0.5
        %v1352 = vmul.f32 %v1328, 0.5
        %v1353 = vmul.f32 %v1329, 0.5
        %v1354 = vmul.f32 %v1330, 0.5
        %v1355 = vmul.f32 %v1331, 0.5
        %v1356 = vadd.f32 %v904, %v1348
        %v1357 = vadd.f32 %v907, %v1349
        %v1358 = vadd.f32 %v910, %v1350
        %v1359 = vadd.f32 %v913, %v1351
        %v1360 = vadd.f32 %v916, %v1352
        %v1361 = vadd.f32 %v919, %v1353
        %v1362 = vadd.f32 %v922, %v1354
        %v1363 = vadd.f32 %v925, %v1355
        %v1364 = vmax.f32 %v1316, 1.0
        %v1365 = vmax.f32 %v1317, 1.0
        %v1366 = vmax.f32 %v1318, 1.0
        %v1367 = vmax.f32 %v1319, 1.0
        %v1368 = vmax.f32 %v1320, 1.0
        %v1369 = vmax.f32 %v1321, 1.0
        %v1370 = vmax.f32 %v1322, 1.0
        %v1371 = vmax.f32 %v1323, 1.0
        %v1372 = vmax.f32 %v1324, 1.0
        %v1373 = vmax.f32 %v1325, 1.0
        %v1374 = vmax.f32 %v1326, 1.0
        %v1375 = vmax.f32 %v1327, 1.0
        %v1376 = vmax.f32 %v1328, 1.0
        %v1377 = vmax.f32 %v1329, 1.0
        %v1378 = vmax.f32 %v1330, 1.0
        %v1379 = vmax.f32 %v1331, 1.0
        %v1380 = vsub.f32 %v1340, %v316
        %v1381 = vsub.f32 %v1341, %v317
        %v1382 = vsub.f32 %v1342, %v318
        %v1383 = vsub.f32 %v1343, %v319
        %v1384 = vsub.f32 %v1344, %v320
        %v1385 = vsub.f32 %v1345, %v321
        %v1386 = vsub.f32 %v1346, %v322
        %v1387 = vsub.f32 %v1347, %v323
        %1388 = vrot.lane.b32.xlu0 %v316, 126
        %v1389 = vpop.permute.xlu0 %1388
        %1390 = vrot.lane.b32.xlu0 %v317, 126
        %v1391 = vpop.permute.xlu0 %1390
        %1392 = vrot.lane.b32.xlu0 %v318, 126
        %v1393 = vpop.permute.xlu0 %1392
        %1394 = vrot.lane.b32.xlu0 %v319, 126
        %v1395 = vpop.permute.xlu0 %1394
        %1396 = vrot.lane.b32.xlu0 %v320, 126
        %v1397 = vpop.permute.xlu0 %1396
        %1398 = vrot.lane.b32.xlu0 %v321, 126
        %v1399 = vpop.permute.xlu0 %1398
        %1400 = vrot.lane.b32.xlu0 %v322, 126
        %v1401 = vpop.permute.xlu0 %1400
        %1402 = vrot.lane.b32.xlu0 %v323, 126
        %v1403 = vpop.permute.xlu0 %1402
        %v1412 = vmul.f32 %v1380, %v1389
        %v1413 = vmul.f32 %v1381, %v1391
        %v1414 = vmul.f32 %v1382, %v1393
        %v1415 = vmul.f32 %v1383, %v1395
        %v1416 = vmul.f32 %v1384, %v1397
        %v1417 = vmul.f32 %v1385, %v1399
        %v1418 = vmul.f32 %v1386, %v1401
        %v1419 = vmul.f32 %v1387, %v1403
        %v1420 = vmul.f32 %v1412, 10.0
        %v1421 = vmul.f32 %v1413, 10.0
        %v1422 = vmul.f32 %v1414, 10.0
        %v1423 = vmul.f32 %v1415, 10.0
        %v1424 = vmul.f32 %v1416, 10.0
        %v1425 = vmul.f32 %v1417, 10.0
        %v1426 = vmul.f32 %v1418, 10.0
        %v1427 = vmul.f32 %v1419, 10.0
        %v1428 = vsub.f32 %v1356, %v316
        %v1429 = vsub.f32 %v1357, %v317
        %v1430 = vsub.f32 %v1358, %v318
        %v1431 = vsub.f32 %v1359, %v319
        %v1432 = vsub.f32 %v1360, %v320
        %v1433 = vsub.f32 %v1361, %v321
        %v1434 = vsub.f32 %v1362, %v322
        %v1435 = vsub.f32 %v1363, %v323
        %v1436 = vmul.f32 %v1428, %v1389
        %v1437 = vmul.f32 %v1429, %v1391
        %v1438 = vmul.f32 %v1430, %v1393
        %v1439 = vmul.f32 %v1431, %v1395
        %v1440 = vmul.f32 %v1432, %v1397
        %v1441 = vmul.f32 %v1433, %v1399
        %v1442 = vmul.f32 %v1434, %v1401
        %v1443 = vmul.f32 %v1435, %v1403
        %v1444 = vmul.f32 %v1436, 10.0
        %v1445 = vmul.f32 %v1437, 10.0
        %v1446 = vmul.f32 %v1438, 10.0
        %v1447 = vmul.f32 %v1439, 10.0
        %v1448 = vmul.f32 %v1440, 10.0
        %v1449 = vmul.f32 %v1441, 10.0
        %v1450 = vmul.f32 %v1442, 10.0
        %v1451 = vmul.f32 %v1443, 10.0
        %v1452 = vmul.f32 %v1364, %v316
        %v1453 = vmul.f32 %v1365, %v317
        %v1454 = vmul.f32 %v1366, %v318
        %v1455 = vmul.f32 %v1367, %v319
        %v1456 = vmul.f32 %v1368, %v320
        %v1457 = vmul.f32 %v1369, %v321
        %v1458 = vmul.f32 %v1370, %v322
        %v1459 = vmul.f32 %v1371, %v323
        %v1460 = vlog2.pop %v1452
        %v1461 = vmul.f32 %v1460, 0.6931472
        %v1462 = vlog2.pop %v1453
        %v1463 = vmul.f32 %v1462, 0.6931472
        %v1464 = vlog2.pop %v1454
        %v1465 = vmul.f32 %v1464, 0.6931472
        %v1466 = vlog2.pop %v1455
        %v1467 = vmul.f32 %v1466, 0.6931472
        %v1468 = vlog2.pop %v1456
        %v1469 = vmul.f32 %v1468, 0.6931472
        %v1470 = vlog2.pop %v1457
        %v1471 = vmul.f32 %v1470, 0.6931472
        %v1472 = vlog2.pop %v1458
        %v1473 = vmul.f32 %v1472, 0.6931472
        %v1474 = vlog2.pop %v1459
        %v1475 = vmul.f32 %v1474, 0.6931472
        %v1476 = vmul.f32 %v1461, 5.0
        %v1477 = vmul.f32 %v1463, 5.0
        %v1478 = vmul.f32 %v1465, 5.0
        %v1479 = vmul.f32 %v1467, 5.0
        %v1480 = vmul.f32 %v1469, 5.0
        %v1481 = vmul.f32 %v1471, 5.0
        %v1482 = vmul.f32 %v1473, 5.0
        %v1483 = vmul.f32 %v1475, 5.0
        %v1484 = vmul.f32 %v1372, %v316
        %v1485 = vmul.f32 %v1373, %v317
        %v1486 = vmul.f32 %v1374, %v318
        %v1487 = vmul.f32 %v1375, %v319
        %v1488 = vmul.f32 %v1376, %v320
        %v1489 = vmul.f32 %v1377, %v321
        %v1490 = vmul.f32 %v1378, %v322
        %v1491 = vmul.f32 %v1379, %v323
        %v1492 = vlog2.pop %v1484
        %v1493 = vmul.f32 %v1492, 0.6931472
        %v1494 = vlog2.pop %v1485
        %v1495 = vmul.f32 %v1494, 0.6931472
        %v1496 = vlog2.pop %v1486
        %v1497 = vmul.f32 %v1496, 0.6931472
        %v1498 = vlog2.pop %v1487
        %v1499 = vmul.f32 %v1498, 0.6931472
        %v1500 = vlog2.pop %v1488
        %v1501 = vmul.f32 %v1500, 0.6931472
        %v1502 = vlog2.pop %v1489
        %v1503 = vmul.f32 %v1502, 0.6931472
        %v1504 = vlog2.pop %v1490
        %v1505 = vmul.f32 %v1504, 0.6931472
        %v1506 = vlog2.pop %v1491
        %v1507 = vmul.f32 %v1506, 0.6931472
        %v1508 = vmul.f32 %v1493, 5.0
        %v1509 = vmul.f32 %v1495, 5.0
        %v1510 = vmul.f32 %v1497, 5.0
        %v1511 = vmul.f32 %v1499, 5.0
        %v1512 = vmul.f32 %v1501, 5.0
        %v1513 = vmul.f32 %v1503, 5.0
        %v1514 = vmul.f32 %v1505, 5.0
        %v1515 = vmul.f32 %v1507, 5.0
        %v1516 = vld [vmem:[%s296] sm:$0xff]
        %v1517 = vld [vmem:[%s296 + $0x8] sm:$0xff]
        %v1518 = vld [vmem:[%s296 + $0x10] sm:$0xff]
        %v1519 = vld [vmem:[%s296 + $0x18] sm:$0xff]
        %v1520 = vld [vmem:[%s296 + $0x20] sm:$0xff]
        %v1521 = vld [vmem:[%s296 + $0x28] sm:$0xff]
        %v1522 = vld [vmem:[%s296 + $0x30] sm:$0xff]
        %v1523 = vld [vmem:[%s296 + $0x38] sm:$0xff]
        %1532 = vrot.lane.b32.xlu0 %v1516, 7
        %v1533 = vpop.permute.xlu0 %1532
        %1534 = vrot.lane.b32.xlu0 %v1517, 7
        %v1535 = vpop.permute.xlu0 %1534
        %1536 = vrot.lane.b32.xlu0 %v1518, 7
        %v1537 = vpop.permute.xlu0 %1536
        %1538 = vrot.lane.b32.xlu0 %v1519, 7
        %v1539 = vpop.permute.xlu0 %1538
        %1540 = vrot.lane.b32.xlu0 %v1520, 7
        %v1541 = vpop.permute.xlu0 %1540
        %1542 = vrot.lane.b32.xlu0 %v1521, 7
        %v1543 = vpop.permute.xlu0 %1542
        %1544 = vrot.lane.b32.xlu0 %v1522, 7
        %v1545 = vpop.permute.xlu0 %1544
        %1546 = vrot.lane.b32.xlu0 %v1523, 7
        %v1547 = vpop.permute.xlu0 %1546
        %v1556 = vsub.f32 %v1420, %v1533
        %v1557 = vsub.f32 %v1421, %v1535
        %v1558 = vsub.f32 %v1422, %v1537
        %v1559 = vsub.f32 %v1423, %v1539
        %v1560 = vsub.f32 %v1424, %v1541
        %v1561 = vsub.f32 %v1425, %v1543
        %v1562 = vsub.f32 %v1426, %v1545
        %v1563 = vsub.f32 %v1427, %v1547
        %v1564 = vand.u32 2147483647, %v1556
        %v1565 = vand.u32 2147483647, %v1557
        %v1566 = vand.u32 2147483647, %v1558
        %v1567 = vand.u32 2147483647, %v1559
        %v1568 = vand.u32 2147483647, %v1560
        %v1569 = vand.u32 2147483647, %v1561
        %v1570 = vand.u32 2147483647, %v1562
        %v1571 = vand.u32 2147483647, %v1563
        %vm1572 = vcmp.le.f32.partialorder %v1564, 0.11111111
        %vm1573 = vcmp.le.f32.partialorder %v1565, 0.11111111
        %vm1574 = vcmp.le.f32.partialorder %v1566, 0.11111111
        %vm1575 = vcmp.le.f32.partialorder %v1567, 0.11111111
        %vm1576 = vcmp.le.f32.partialorder %v1568, 0.11111111
        %vm1577 = vcmp.le.f32.partialorder %v1569, 0.11111111
        %vm1578 = vcmp.le.f32.partialorder %v1570, 0.11111111
        %vm1579 = vcmp.le.f32.partialorder %v1571, 0.11111111
        %v1580 = vmul.f32 %v1564, 4.5
        %v1581 = vmul.f32 %v1565, 4.5
        %v1582 = vmul.f32 %v1566, 4.5
        %v1583 = vmul.f32 %v1567, 4.5
        %v1584 = vmul.f32 %v1568, 4.5
        %v1585 = vmul.f32 %v1569, 4.5
        %v1586 = vmul.f32 %v1570, 4.5
        %v1587 = vmul.f32 %v1571, 4.5
        %v1588 = vmul.f32 %v1580, %v1564
        %v1589 = vmul.f32 %v1581, %v1565
        %v1590 = vmul.f32 %v1582, %v1566
        %v1591 = vmul.f32 %v1583, %v1567
        %v1592 = vmul.f32 %v1584, %v1568
        %v1593 = vmul.f32 %v1585, %v1569
        %v1594 = vmul.f32 %v1586, %v1570
        %v1595 = vmul.f32 %v1587, %v1571
        %v1596 = vsub.f32 %v1564, 0.055555556
        %v1597 = vsub.f32 %v1565, 0.055555556
        %v1598 = vsub.f32 %v1566, 0.055555556
        %v1599 = vsub.f32 %v1567, 0.055555556
        %v1600 = vsub.f32 %v1568, 0.055555556
        %v1601 = vsub.f32 %v1569, 0.055555556
        %v1602 = vsub.f32 %v1570, 0.055555556
        %v1603 = vsub.f32 %v1571, 0.055555556
        %v1604 = vsel %vm1572, %v1588, %v1596
        %v1605 = vsel %vm1573, %v1589, %v1597
        %v1606 = vsel %vm1574, %v1590, %v1598
        %v1607 = vsel %vm1575, %v1591, %v1599
        %v1608 = vsel %vm1576, %v1592, %v1600
        %v1609 = vsel %vm1577, %v1593, %v1601
        %v1610 = vsel %vm1578, %v1594, %v1602
        %v1611 = vsel %vm1579, %v1595, %v1603
        %v1612 = vsel %vm1034, %v1604, 0.0
        %v1613 = vsel %vm1035, %v1605, 0.0
        %v1614 = vsel %vm1036, %v1606, 0.0
        %v1615 = vsel %vm1037, %v1607, 0.0
        %v1616 = vsel %vm1038, %v1608, 0.0
        %v1617 = vsel %vm1039, %v1609, 0.0
        %v1618 = vsel %vm1040, %v1610, 0.0
        %v1619 = vsel %vm1041, %v1611, 0.0
        %1628 = vrot.lane.b32.xlu0 %v1612, 121
        %v1629 = vpop.permute.xlu0 %1628
        %1630 = vrot.lane.b32.xlu0 %v1613, 121
        %v1631 = vpop.permute.xlu0 %1630
        %1632 = vrot.lane.b32.xlu0 %v1614, 121
        %v1633 = vpop.permute.xlu0 %1632
        %1634 = vrot.lane.b32.xlu0 %v1615, 121
        %v1635 = vpop.permute.xlu0 %1634
        %1636 = vrot.lane.b32.xlu0 %v1616, 121
        %v1637 = vpop.permute.xlu0 %1636
        %1638 = vrot.lane.b32.xlu0 %v1617, 121
        %v1639 = vpop.permute.xlu0 %1638
        %1640 = vrot.lane.b32.xlu0 %v1618, 121
        %v1641 = vpop.permute.xlu0 %1640
        %1642 = vrot.lane.b32.xlu0 %v1619, 121
        %v1643 = vpop.permute.xlu0 %1642
        %v1652 = vsel %vm1066, %v1629, 0.0
        %v1653 = vsel %vm1066, %v1631, 0.0
        %v1654 = vadd.f32 %v1652, %v1653
        %v1655 = vsel %vm1066, %v1633, 0.0
        %v1656 = vadd.f32 %v1654, %v1655
        %v1657 = vsel %vm1066, %v1635, 0.0
        %v1658 = vadd.f32 %v1656, %v1657
        %v1659 = vsel %vm1066, %v1637, 0.0
        %v1660 = vadd.f32 %v1658, %v1659
        %v1661 = vsel %vm1066, %v1639, 0.0
        %v1662 = vadd.f32 %v1660, %v1661
        %v1663 = vsel %vm1066, %v1641, 0.0
        %v1664 = vadd.f32 %v1662, %v1663
        %v1665 = vsel %vm1066, %v1643, 0.0
        %v1666 = vadd.f32 %v1664, %v1665
        %1667 = vadd.xlane.f32.xlu0 %v1666
        %v1668 = vpop.xlane.xlu0 %1667
        %v1669 = vrot.slane %v1668, 4
        %v1670 = vadd.f32 %v1668, %v1669
        %v1671 = vrot.slane %v1670, 2
        %v1672 = vadd.f32 %v1670, %v1671
        %v1673 = vrot.slane %v1672, 1
        %v1674 = vadd.f32 %v1672, %v1673
        %s1675 = vtos %v1674
        %v1676 = vstv %s1675
        %v1677 = vsub.f32 %v1444, %v1533
        %v1678 = vsub.f32 %v1445, %v1535
        %v1679 = vsub.f32 %v1446, %v1537
        %v1680 = vsub.f32 %v1447, %v1539
        %v1681 = vsub.f32 %v1448, %v1541
        %v1682 = vsub.f32 %v1449, %v1543
        %v1683 = vsub.f32 %v1450, %v1545
        %v1684 = vsub.f32 %v1451, %v1547
        %v1685 = vand.u32 2147483647, %v1677
        %v1686 = vand.u32 2147483647, %v1678
        %v1687 = vand.u32 2147483647, %v1679
        %v1688 = vand.u32 2147483647, %v1680
        %v1689 = vand.u32 2147483647, %v1681
        %v1690 = vand.u32 2147483647, %v1682
        %v1691 = vand.u32 2147483647, %v1683
        %v1692 = vand.u32 2147483647, %v1684
        %vm1693 = vcmp.le.f32.partialorder %v1685, 0.11111111
        %vm1694 = vcmp.le.f32.partialorder %v1686, 0.11111111
        %vm1695 = vcmp.le.f32.partialorder %v1687, 0.11111111
        %vm1696 = vcmp.le.f32.partialorder %v1688, 0.11111111
        %vm1697 = vcmp.le.f32.partialorder %v1689, 0.11111111
        %vm1698 = vcmp.le.f32.partialorder %v1690, 0.11111111
        %vm1699 = vcmp.le.f32.partialorder %v1691, 0.11111111
        %vm1700 = vcmp.le.f32.partialorder %v1692, 0.11111111
        %v1701 = vmul.f32 %v1685, 4.5
        %v1702 = vmul.f32 %v1686, 4.5
        %v1703 = vmul.f32 %v1687, 4.5
        %v1704 = vmul.f32 %v1688, 4.5
        %v1705 = vmul.f32 %v1689, 4.5
        %v1706 = vmul.f32 %v1690, 4.5
        %v1707 = vmul.f32 %v1691, 4.5
        %v1708 = vmul.f32 %v1692, 4.5
        %v1709 = vmul.f32 %v1701, %v1685
        %v1710 = vmul.f32 %v1702, %v1686
        %v1711 = vmul.f32 %v1703, %v1687
        %v1712 = vmul.f32 %v1704, %v1688
        %v1713 = vmul.f32 %v1705, %v1689
        %v1714 = vmul.f32 %v1706, %v1690
        %v1715 = vmul.f32 %v1707, %v1691
        %v1716 = vmul.f32 %v1708, %v1692
        %v1717 = vsub.f32 %v1685, 0.055555556
        %v1718 = vsub.f32 %v1686, 0.055555556
        %v1719 = vsub.f32 %v1687, 0.055555556
        %v1720 = vsub.f32 %v1688, 0.055555556
        %v1721 = vsub.f32 %v1689, 0.055555556
        %v1722 = vsub.f32 %v1690, 0.055555556
        %v1723 = vsub.f32 %v1691, 0.055555556
        %v1724 = vsub.f32 %v1692, 0.055555556
        %v1725 = vsel %vm1693, %v1709, %v1717
        %v1726 = vsel %vm1694, %v1710, %v1718
        %v1727 = vsel %vm1695, %v1711, %v1719
        %v1728 = vsel %vm1696, %v1712, %v1720
        %v1729 = vsel %vm1697, %v1713, %v1721
        %v1730 = vsel %vm1698, %v1714, %v1722
        %v1731 = vsel %vm1699, %v1715, %v1723
        %v1732 = vsel %vm1700, %v1716, %v1724
        %v1733 = vsel %vm1034, %v1725, 0.0
        %v1734 = vsel %vm1035, %v1726, 0.0
        %v1735 = vsel %vm1036, %v1727, 0.0
        %v1736 = vsel %vm1037, %v1728, 0.0
        %v1737 = vsel %vm1038, %v1729, 0.0
        %v1738 = vsel %vm1039, %v1730, 0.0
        %v1739 = vsel %vm1040, %v1731, 0.0
        %v1740 = vsel %vm1041, %v1732, 0.0
        %1749 = vrot.lane.b32.xlu0 %v1733, 120
        %v1750 = vpop.permute.xlu0 %1749
        %1751 = vrot.lane.b32.xlu0 %v1734, 120
        %v1752 = vpop.permute.xlu0 %1751
        %1753 = vrot.lane.b32.xlu0 %v1735, 120
        %v1754 = vpop.permute.xlu0 %1753
        %1755 = vrot.lane.b32.xlu0 %v1736, 120
        %v1756 = vpop.permute.xlu0 %1755
        %1757 = vrot.lane.b32.xlu0 %v1737, 120
        %v1758 = vpop.permute.xlu0 %1757
        %1759 = vrot.lane.b32.xlu0 %v1738, 120
        %v1760 = vpop.permute.xlu0 %1759
        %1761 = vrot.lane.b32.xlu0 %v1739, 120
        %v1762 = vpop.permute.xlu0 %1761
        %1763 = vrot.lane.b32.xlu0 %v1740, 120
        %v1764 = vpop.permute.xlu0 %1763
        %v1773 = vsel %vm1066, %v1750, 0.0
        %v1774 = vsel %vm1066, %v1752, 0.0
        %v1775 = vadd.f32 %v1773, %v1774
        %v1776 = vsel %vm1066, %v1754, 0.0
        %v1777 = vadd.f32 %v1775, %v1776
        %v1778 = vsel %vm1066, %v1756, 0.0
        %v1779 = vadd.f32 %v1777, %v1778
        %v1780 = vsel %vm1066, %v1758, 0.0
        %v1781 = vadd.f32 %v1779, %v1780
        %v1782 = vsel %vm1066, %v1760, 0.0
        %v1783 = vadd.f32 %v1781, %v1782
        %v1784 = vsel %vm1066, %v1762, 0.0
        %v1785 = vadd.f32 %v1783, %v1784
        %v1786 = vsel %vm1066, %v1764, 0.0
        %v1787 = vadd.f32 %v1785, %v1786
        %1788 = vadd.xlane.f32.xlu0 %v1787
        %v1789 = vpop.xlane.xlu0 %1788
        %v1790 = vrot.slane %v1789, 4
        %v1791 = vadd.f32 %v1789, %v1790
        %v1792 = vrot.slane %v1791, 2
        %v1793 = vadd.f32 %v1791, %v1792
        %v1794 = vrot.slane %v1793, 1
        %v1795 = vadd.f32 %v1793, %v1794
        %s1796 = vtos %v1795
        %v1797 = vstv %s1796
        %v1798 = vadd.f32 %v1676, %v1797
        %v1799 = vsub.f32 %v1476, %v1533
        %v1800 = vsub.f32 %v1477, %v1535
        %v1801 = vsub.f32 %v1478, %v1537
        %v1802 = vsub.f32 %v1479, %v1539
        %v1803 = vsub.f32 %v1480, %v1541
        %v1804 = vsub.f32 %v1481, %v1543
        %v1805 = vsub.f32 %v1482, %v1545
        %v1806 = vsub.f32 %v1483, %v1547
        %v1807 = vand.u32 2147483647, %v1799
        %v1808 = vand.u32 2147483647, %v1800
        %v1809 = vand.u32 2147483647, %v1801
        %v1810 = vand.u32 2147483647, %v1802
        %v1811 = vand.u32 2147483647, %v1803
        %v1812 = vand.u32 2147483647, %v1804
        %v1813 = vand.u32 2147483647, %v1805
        %v1814 = vand.u32 2147483647, %v1806
        %vm1815 = vcmp.le.f32.partialorder %v1807, 0.11111111
        %vm1816 = vcmp.le.f32.partialorder %v1808, 0.11111111
        %vm1817 = vcmp.le.f32.partialorder %v1809, 0.11111111
        %vm1818 = vcmp.le.f32.partialorder %v1810, 0.11111111
        %vm1819 = vcmp.le.f32.partialorder %v1811, 0.11111111
        %vm1820 = vcmp.le.f32.partialorder %v1812, 0.11111111
        %vm1821 = vcmp.le.f32.partialorder %v1813, 0.11111111
        %vm1822 = vcmp.le.f32.partialorder %v1814, 0.11111111
        %v1823 = vmul.f32 %v1807, 4.5
        %v1824 = vmul.f32 %v1808, 4.5
        %v1825 = vmul.f32 %v1809, 4.5
        %v1826 = vmul.f32 %v1810, 4.5
        %v1827 = vmul.f32 %v1811, 4.5
        %v1828 = vmul.f32 %v1812, 4.5
        %v1829 = vmul.f32 %v1813, 4.5
        %v1830 = vmul.f32 %v1814, 4.5
        %v1831 = vmul.f32 %v1823, %v1807
        %v1832 = vmul.f32 %v1824, %v1808
        %v1833 = vmul.f32 %v1825, %v1809
        %v1834 = vmul.f32 %v1826, %v1810
        %v1835 = vmul.f32 %v1827, %v1811
        %v1836 = vmul.f32 %v1828, %v1812
        %v1837 = vmul.f32 %v1829, %v1813
        %v1838 = vmul.f32 %v1830, %v1814
        %v1839 = vsub.f32 %v1807, 0.055555556
        %v1840 = vsub.f32 %v1808, 0.055555556
        %v1841 = vsub.f32 %v1809, 0.055555556
        %v1842 = vsub.f32 %v1810, 0.055555556
        %v1843 = vsub.f32 %v1811, 0.055555556
        %v1844 = vsub.f32 %v1812, 0.055555556
        %v1845 = vsub.f32 %v1813, 0.055555556
        %v1846 = vsub.f32 %v1814, 0.055555556
        %v1847 = vsel %vm1815, %v1831, %v1839
        %v1848 = vsel %vm1816, %v1832, %v1840
        %v1849 = vsel %vm1817, %v1833, %v1841
        %v1850 = vsel %vm1818, %v1834, %v1842
        %v1851 = vsel %vm1819, %v1835, %v1843
        %v1852 = vsel %vm1820, %v1836, %v1844
        %v1853 = vsel %vm1821, %v1837, %v1845
        %v1854 = vsel %vm1822, %v1838, %v1846
        %v1855 = vsel %vm1034, %v1847, 0.0
        %v1856 = vsel %vm1035, %v1848, 0.0
        %v1857 = vsel %vm1036, %v1849, 0.0
        %v1858 = vsel %vm1037, %v1850, 0.0
        %v1859 = vsel %vm1038, %v1851, 0.0
        %v1860 = vsel %vm1039, %v1852, 0.0
        %v1861 = vsel %vm1040, %v1853, 0.0
        %v1862 = vsel %vm1041, %v1854, 0.0
        %1871 = vrot.lane.b32.xlu0 %v1855, 119
        %v1872 = vpop.permute.xlu0 %1871
        %1873 = vrot.lane.b32.xlu0 %v1856, 119
        %v1874 = vpop.permute.xlu0 %1873
        %1875 = vrot.lane.b32.xlu0 %v1857, 119
        %v1876 = vpop.permute.xlu0 %1875
        %1877 = vrot.lane.b32.xlu0 %v1858, 119
        %v1878 = vpop.permute.xlu0 %1877
        %1879 = vrot.lane.b32.xlu0 %v1859, 119
        %v1880 = vpop.permute.xlu0 %1879
        %1881 = vrot.lane.b32.xlu0 %v1860, 119
        %v1882 = vpop.permute.xlu0 %1881
        %1883 = vrot.lane.b32.xlu0 %v1861, 119
        %v1884 = vpop.permute.xlu0 %1883
        %1885 = vrot.lane.b32.xlu0 %v1862, 119
        %v1886 = vpop.permute.xlu0 %1885
        %v1895 = vsel %vm1066, %v1872, 0.0
        %v1896 = vsel %vm1066, %v1874, 0.0
        %v1897 = vadd.f32 %v1895, %v1896
        %v1898 = vsel %vm1066, %v1876, 0.0
        %v1899 = vadd.f32 %v1897, %v1898
        %v1900 = vsel %vm1066, %v1878, 0.0
        %v1901 = vadd.f32 %v1899, %v1900
        %v1902 = vsel %vm1066, %v1880, 0.0
        %v1903 = vadd.f32 %v1901, %v1902
        %v1904 = vsel %vm1066, %v1882, 0.0
        %v1905 = vadd.f32 %v1903, %v1904
        %v1906 = vsel %vm1066, %v1884, 0.0
        %v1907 = vadd.f32 %v1905, %v1906
        %v1908 = vsel %vm1066, %v1886, 0.0
        %v1909 = vadd.f32 %v1907, %v1908
        %1910 = vadd.xlane.f32.xlu0 %v1909
        %v1911 = vpop.xlane.xlu0 %1910
        %v1912 = vrot.slane %v1911, 4
        %v1913 = vadd.f32 %v1911, %v1912
        %v1914 = vrot.slane %v1913, 2
        %v1915 = vadd.f32 %v1913, %v1914
        %v1916 = vrot.slane %v1915, 1
        %v1917 = vadd.f32 %v1915, %v1916
        %s1918 = vtos %v1917
        %v1919 = vstv %s1918
        %v1920 = vadd.f32 %v1798, %v1919
        %v1921 = vsub.f32 %v1508, %v1533
        %v1922 = vsub.f32 %v1509, %v1535
        %v1923 = vsub.f32 %v1510, %v1537
        %v1924 = vsub.f32 %v1511, %v1539
        %v1925 = vsub.f32 %v1512, %v1541
        %v1926 = vsub.f32 %v1513, %v1543
        %v1927 = vsub.f32 %v1514, %v1545
        %v1928 = vsub.f32 %v1515, %v1547
        %v1929 = vand.u32 2147483647, %v1921
        %v1930 = vand.u32 2147483647, %v1922
        %v1931 = vand.u32 2147483647, %v1923
        %v1932 = vand.u32 2147483647, %v1924
        %v1933 = vand.u32 2147483647, %v1925
        %v1934 = vand.u32 2147483647, %v1926
        %v1935 = vand.u32 2147483647, %v1927
        %v1936 = vand.u32 2147483647, %v1928
        %vm1937 = vcmp.le.f32.partialorder %v1929, 0.11111111
        %vm1938 = vcmp.le.f32.partialorder %v1930, 0.11111111
        %vm1939 = vcmp.le.f32.partialorder %v1931, 0.11111111
        %vm1940 = vcmp.le.f32.partialorder %v1932, 0.11111111
        %vm1941 = vcmp.le.f32.partialorder %v1933, 0.11111111
        %vm1942 = vcmp.le.f32.partialorder %v1934, 0.11111111
        %vm1943 = vcmp.le.f32.partialorder %v1935, 0.11111111
        %vm1944 = vcmp.le.f32.partialorder %v1936, 0.11111111
        %v1945 = vmul.f32 %v1929, 4.5
        %v1946 = vmul.f32 %v1930, 4.5
        %v1947 = vmul.f32 %v1931, 4.5
        %v1948 = vmul.f32 %v1932, 4.5
        %v1949 = vmul.f32 %v1933, 4.5
        %v1950 = vmul.f32 %v1934, 4.5
        %v1951 = vmul.f32 %v1935, 4.5
        %v1952 = vmul.f32 %v1936, 4.5
        %v1953 = vmul.f32 %v1945, %v1929
        %v1954 = vmul.f32 %v1946, %v1930
        %v1955 = vmul.f32 %v1947, %v1931
        %v1956 = vmul.f32 %v1948, %v1932
        %v1957 = vmul.f32 %v1949, %v1933
        %v1958 = vmul.f32 %v1950, %v1934
        %v1959 = vmul.f32 %v1951, %v1935
        %v1960 = vmul.f32 %v1952, %v1936
        %v1961 = vsub.f32 %v1929, 0.055555556
        %v1962 = vsub.f32 %v1930, 0.055555556
        %v1963 = vsub.f32 %v1931, 0.055555556
        %v1964 = vsub.f32 %v1932, 0.055555556
        %v1965 = vsub.f32 %v1933, 0.055555556
        %v1966 = vsub.f32 %v1934, 0.055555556
        %v1967 = vsub.f32 %v1935, 0.055555556
        %v1968 = vsub.f32 %v1936, 0.055555556
        %v1969 = vsel %vm1937, %v1953, %v1961
        %v1970 = vsel %vm1938, %v1954, %v1962
        %v1971 = vsel %vm1939, %v1955, %v1963
        %v1972 = vsel %vm1940, %v1956, %v1964
        %v1973 = vsel %vm1941, %v1957, %v1965
        %v1974 = vsel %vm1942, %v1958, %v1966
        %v1975 = vsel %vm1943, %v1959, %v1967
        %v1976 = vsel %vm1944, %v1960, %v1968
        %v1977 = vsel %vm1034, %v1969, 0.0
        %v1978 = vsel %vm1035, %v1970, 0.0
        %v1979 = vsel %vm1036, %v1971, 0.0
        %v1980 = vsel %vm1037, %v1972, 0.0
        %v1981 = vsel %vm1038, %v1973, 0.0
        %v1982 = vsel %vm1039, %v1974, 0.0
        %v1983 = vsel %vm1040, %v1975, 0.0
        %v1984 = vsel %vm1041, %v1976, 0.0
        %1993 = vrot.lane.b32.xlu0 %v1977, 118
        %v1994 = vpop.permute.xlu0 %1993
        %1995 = vrot.lane.b32.xlu0 %v1978, 118
        %v1996 = vpop.permute.xlu0 %1995
        %1997 = vrot.lane.b32.xlu0 %v1979, 118
        %v1998 = vpop.permute.xlu0 %1997
        %1999 = vrot.lane.b32.xlu0 %v1980, 118
        %v2000 = vpop.permute.xlu0 %1999
        %2001 = vrot.lane.b32.xlu0 %v1981, 118
        %v2002 = vpop.permute.xlu0 %2001
        %2003 = vrot.lane.b32.xlu0 %v1982, 118
        %v2004 = vpop.permute.xlu0 %2003
        %2005 = vrot.lane.b32.xlu0 %v1983, 118
        %v2006 = vpop.permute.xlu0 %2005
        %2007 = vrot.lane.b32.xlu0 %v1984, 118
        %v2008 = vpop.permute.xlu0 %2007
        %v2017 = vsel %vm1066, %v1994, 0.0
        %v2018 = vsel %vm1066, %v1996, 0.0
        %v2019 = vadd.f32 %v2017, %v2018
        %v2020 = vsel %vm1066, %v1998, 0.0
        %v2021 = vadd.f32 %v2019, %v2020
        %v2022 = vsel %vm1066, %v2000, 0.0
        %v2023 = vadd.f32 %v2021, %v2022
        %v2024 = vsel %vm1066, %v2002, 0.0
        %v2025 = vadd.f32 %v2023, %v2024
        %v2026 = vsel %vm1066, %v2004, 0.0
        %v2027 = vadd.f32 %v2025, %v2026
        %v2028 = vsel %vm1066, %v2006, 0.0
        %v2029 = vadd.f32 %v2027, %v2028
        %v2030 = vsel %vm1066, %v2008, 0.0
        %v2031 = vadd.f32 %v2029, %v2030
        %2032 = vadd.xlane.f32.xlu0 %v2031
        %v2033 = vpop.xlane.xlu0 %2032
        %v2034 = vrot.slane %v2033, 4
        %v2035 = vadd.f32 %v2033, %v2034
        %v2036 = vrot.slane %v2035, 2
        %v2037 = vadd.f32 %v2035, %v2036
        %v2038 = vrot.slane %v2037, 1
        %v2039 = vadd.f32 %v2037, %v2038
        %s2040 = vtos %v2039
        %v2041 = vstv %s2040
        %v2042 = vadd.f32 %v1920, %v2041
        %vm2043 = vcmp.eq.s32.totalorder %v328, 0
        %vm2044 = vcmp.eq.s32.totalorder %v328, 1
        %vm2045 = vcmp.eq.s32.totalorder %v328, 2
        %v2046 = vstv %s1090
        %v2047 = vsel %vm2045, %v2046, 0.0
        %v2048 = vsel %vm2044, %v2042, %v2047
        %v2049 = vstv %s1315
        %v2050 = vsel %vm2043, %v2049, %v2048
        %v2051 = vld [vmem:[%s305] sm:$0xff]
        %v2052 = vadd.f32 %v2051, %v2050
        %2053 = vst [vmem:[%s305] sm:$0xff] %v2052
      $region44: #{focal_loss.1} parent=35 // pred_fallthru
        _
      %p2054 = scmp.lt.s32.totalorder %s26, 2
      %s2055 = scalar_select %p2054, %s26, 2
      %s2056 = smul.addr %s2055, 8
      %s2057 = scalar_lea.vmem %s5, %s2056
      // Predicated region
      $region45: #{focal_loss.1} parent=35 // pred_check
        %p2058 = pneg %p160
      $region46: #{focal_loss.1} parent=35 // pred_check_branch
        %2060 = sbr.rel (%p2058) target = $region48
      $region47: #{focal_loss.1} parent=35 // pred_region
        _
      $region48: #{focal_loss.1} parent=35 // pred_fallthru
        _
    $region36: #{focal_loss.1} parent=5 // pred_fallthru
      _
    %p2061 = scmp.le.s32.totalorder 2, %s17
    // Predicated region
    $region49: #{focal_loss.1} parent=5 // pred_check
      %p2062 = pneg %p2061
    $region50: #{focal_loss.1} parent=5 // pred_check_branch
      %2064 = sbr.rel (%p2062) target = $region52
    $region51: #{focal_loss.1} parent=5 // pred_region
      %s2065 = ssub.s32 %s17, 2
      // Predicated region
      $region53: #{focal_loss.1} parent=51 // pred_check
        %p2066 = pneg %p166
      $region54: #{focal_loss.1} parent=51 // pred_check_branch
        %2068 = sbr.rel (%p2066) target = $region56
      $region55: #{focal_loss.1} parent=51 // pred_region
        %p2069 = scmp.lt.s32.totalorder %s28, 2
        %s2070 = scalar_select %p2069, %s28, 2
        %s2071 = smul.addr %s2070, 8
        %s2072 = scalar_lea.vmem %s5, %s2071
      $region56: #{focal_loss.1} parent=51 // pred_fallthru
        _
    $region52: #{focal_loss.1} parent=5 // pred_fallthru
      _
  $region6: #{focal_loss.1} parent=0 // loop_footer
    %s21 = sadd.s32 1, %s17
  $region7: #{focal_loss.1} parent=0 // loop_footer_branch
    %16 = sbr.rel target = $region3
  $region8: #{focal_loss.1} parent=0 // loop_exit
    _

</llo_original>
